<compile_context>
chip_gen: v7x
topology: tpu7x:2x2x1
jax: 0.10.0
libtpu: 0.0.40
codegen_flags: <defaults>
</compile_context>

<pallas_src>
import jax
import jax.numpy as jnp
from jax.experimental import pallas as pl
from jax.experimental.pallas import tpu as pltpu

_LANE = 128      # lane width (last-dim tiling unit)
_SUBLANE = 8     # f32 sublane width (second-to-last dim tiling unit)
_NEG_INF = -1e30


def _round_up(x, m):
    return ((x + m - 1) // m) * m


# --------------------------------- kernel ------------------------------------

def _make_mlp_kernel(num_hidden_layers, compute_dtype):
    """Per-batch-tile MLP kernel.

    Ref order: x_ref, (w_ref, b_ref) * num_hidden_layers, w_out_ref, b_out_ref, out_ref.
    Weights are pre-transposed [in, out], pre-padded and pre-cast to compute_dtype.
    The output-layer bias has -1e30 baked into its padded class lanes, so no in-kernel
    class masking is needed before log_softmax.
    """

    def kernel(*refs):
        x_ref = refs[0]
        out_ref = refs[-1]
        p = refs[1:-1]

        # Cast once; every MXU pass runs in compute_dtype (bf16 by default) and
        # accumulates in f32 via preferred_element_type.
        h = x_ref[...].astype(compute_dtype)

        # Hidden layers: Linear -> ReLU -> Dropout (identity in eval mode).
        # TODO(synk): training-mode dropout would go here (pltpu.prng_random_bits mask).
        for i in range(num_hidden_layers):
            w_ref = p[2 * i]
            b_ref = p[2 * i + 1]
            acc = jnp.dot(h, w_ref[...], preferred_element_type=jnp.float32)
            acc = jnp.maximum(acc + b_ref[...], 0.0)     # f32 bias add + ReLU on the VPU
            h = acc.astype(compute_dtype)                # single cast back for next MXU pass

        # Output layer.
        wo_ref, bo_ref = p[-2], p[-1]
        logits = jnp.dot(h, wo_ref[...], preferred_element_type=jnp.float32)
        logits = logits + bo_ref[...]    # padded class lanes already carry -1e30

        # Numerically stable log_softmax over the lane-dense (128-padded) class axis.
        m = jnp.max(logits, axis=1, keepdims=True)
        shifted = logits - m
        lse = jnp.log(jnp.sum(jnp.exp(shifted), axis=1, keepdims=True))
        out_ref[...] = (shifted - lse).astype(out_ref.dtype)

    return kernel


# ------------------------- one-time parameter prep ---------------------------

def prepare_classifier_params(params, *, compute_dtype=jnp.bfloat16):
    """Pad / cast parameters ONCE (hoisted out of the forward path).

    params: list of (W, b); W is [in, out] (pre-transposed), b is [1, out] or [out].
            Last tuple is the output layer, the rest are hidden layers.
    Returns (flat_params, meta):
      flat_params = [W0, b0, W1, b1, ..., Wout, bout] padded to lane multiples on the
      output dim (first-layer input dim stays unpadded to match unpadded x); weights
      are stored in compute_dtype, biases in f32; the output bias carries -1e30 in
      its padded class lanes.
    """
    num_hidden = len(params) - 1
    in_features = params[0][0].shape[0]
    out_features = params[-1][0].shape[1]

    flat = []
    prev_out_padded = in_features          # first-layer K is the raw (unpadded) input size
    for li, (w, b) in enumerate(params):
        kin, kout = w.shape
        b = jnp.reshape(b, (1, kout))
        is_output = (li == num_hidden)
        kin_p = prev_out_padded
        kout_p = _round_up(kout, _LANE)
        w_p = jnp.zeros((kin_p, kout_p), compute_dtype).at[:kin, :kout].set(
            w.astype(compute_dtype))
        # Hidden layers: zero-pad bias (padded activations stay exactly 0 after ReLU).
        # Output layer: bake the class-lane mask into the bias (-1e30 on padded lanes).
        fill = _NEG_INF if is_output else 0.0
        b_p = jnp.full((1, kout_p), fill, jnp.float32).at[:, :kout].set(
            b.astype(jnp.float32))
        flat.append(w_p)
        flat.append(b_p)
        prev_out_padded = kout_p

    meta = dict(num_hidden=num_hidden,
                in_features=in_features,
                out_features=out_features,
                out_padded=prev_out_padded,
                compute_dtype=compute_dtype)
    return flat, meta


# ------------------------------- forward pass --------------------------------

def classifier_net_forward(x, flat_params, meta, *, block_batch=512):
    """Forward pass of Classifier_net (inference / eval mode).

    x:            [B, input_size] float array (feature dim left unpadded).
    flat_params:  output of prepare_classifier_params (padded + cast once, reused).
    block_batch:  target batch tile (256-512 recommended); batches <= tile use grid=(1,).
    """
    batch, in_features = x.shape
    assert in_features == meta["in_features"], "input feature size mismatch"
    out_features = meta["out_features"]
    out_p = meta["out_padded"]
    num_hidden = meta["num_hidden"]

    # Batch tile: large to amortize the ~0.35us/step overhead + MXU fill/drain;
    # for small batches collapse to a single grid step.
    if batch <= block_batch:
        tb = _round_up(batch, _SUBLANE)
    else:
        tb = _round_up(block_batch, _SUBLANE)
    batch_p = _round_up(batch, tb)

    if batch_p != batch:
        x_in = jnp.zeros((batch_p, in_features), x.dtype).at[:batch].set(x)
    else:
        x_in = x   # no HBM round trip: feature dim unpadded, batch already aligned

    grid = (batch_p // tb,)

    # x / out tiled over the batch grid (auto double-buffered / pipelined).
    x_spec = pl.BlockSpec((tb, in_features), lambda i: (i, 0))
    out_spec = pl.BlockSpec((tb, out_p), lambda i: (i, 0))

    # Weights / biases: constant index_map -> VMEM resident across grid steps.
    # Single-buffer them (no point double-buffering a constant block) to halve the
    # resident-weight VMEM footprint (important on v7x's 64 MiB/TC budget).
    def _resident_spec(shape):
        try:
            return pl.BlockSpec(shape, lambda i: (0, 0),
                                pipeline_mode=pl.Buffered(buffer_count=1))
        except (TypeError, AttributeError):
            return pl.BlockSpec(shape, lambda i: (0, 0))

    param_specs = [_resident_spec(p.shape) for p in flat_params]

    # ---- VMEM budget & cost estimate ----------------------------------------
    weight_mats = flat_params[0::2]
    param_bytes = sum(int(p.size) * p.dtype.itemsize for p in flat_params)
    act_bytes = 2 * tb * in_features * x_in.dtype.itemsize + 2 * tb * out_p * 4
    widest = max(int(w.shape[1]) for w in weight_mats)
    scratch_bytes = 4 * tb * widest * 4           # slack for the f32 intermediate h
    vmem_limit = int(min(48 * 2**20,
                         max(16 * 2**20,
                             2 * (param_bytes + act_bytes + scratch_bytes))))

    flops = int(sum(2 * batch_p * int(w.shape[0]) * int(w.shape[1])
                    for w in weight_mats))
    transcendentals = int(batch_p * out_p)        # exp in log_softmax
    bytes_accessed = int(int(x_in.size) * x_in.dtype.itemsize
                         + param_bytes + batch_p * out_p * 4)

    kernel = _make_mlp_kernel(num_hidden, meta["compute_dtype"])

    out_padded = pl.pallas_call(
        kernel,
        out_shape=jax.ShapeDtypeStruct((batch_p, out_p), jnp.float32),
        grid=grid,
        in_specs=[x_spec] + param_specs,
        out_specs=out_spec,
        compiler_params=pltpu.CompilerParams(
            dimension_semantics=("parallel",),     # megacore sharding on v7x
            vmem_limit_bytes=vmem_limit),
        cost_estimate=pl.CostEstimate(
            flops=flops,
            transcendentals=transcendentals,
            bytes_accessed=bytes_accessed),
    )(x_in, *flat_params)

    # Slice off batch / class padding (padded rows hold garbage log_softmax).
    return out_padded[:batch, :out_features]


# --------------------------- parameter construction --------------------------

def init_linear_params(key, in_features, out_features):
    """Deterministic init mirroring nn.Linear's default U(-1/sqrt(in), 1/sqrt(in)).
    Weight returned pre-transposed as [in, out]; bias as [1, out]."""
    kw, kb = jax.random.split(key)
    bound = 1.0 / jnp.sqrt(jnp.float32(in_features))
    w = jax.random.uniform(kw, (in_features, out_features), jnp.float32, -bound, bound)
    b = jax.random.uniform(kb, (1, out_features), jnp.float32, -bound, bound)
    return w, b


def build_classifier_params(key, input_size, output_size, hidden_layers):
    sizes = [input_size] + list(hidden_layers) + [output_size]
    params = []
    keys = jax.random.split(key, len(sizes) - 1)
    for k, (h1, h2) in zip(keys, zip(sizes[:-1], sizes[1:])):
        params.append(init_linear_params(k, h1, h2))
    return params


def classifier_net_reference(x, params):
    """Pure-JAX f32 reference (highest matmul precision) for correctness checking."""
    h = x
    for w, b in params[:-1]:
        h = jnp.maximum(jnp.dot(h, w, precision=jax.lax.Precision.HIGHEST) + b, 0.0)
    w, b = params[-1]
    logits = jnp.dot(h, w, precision=jax.lax.Precision.HIGHEST) + b
    return jax.nn.log_softmax(logits, axis=1)


if __name__ == "__main__":
    # Shape-consistent small config: input_size=32, hidden_layers=[64, 32], output_size=16.
    input_size = 32
    output_size = 16
    hidden_layers = [64, 32]

    root_key = jax.random.PRNGKey(0)
    k_params, k_x1, k_x2 = jax.random.split(root_key, 3)
    params = build_classifier_params(k_params, input_size, output_size, hidden_layers)

    # ---- default bf16 MXU path; batch > tile -> 2 pipelined grid steps -------
    flat_bf16, meta_bf16 = prepare_classifier_params(params, compute_dtype=jnp.bfloat16)
    x1 = jax.random.normal(k_x1, (512, input_size), jnp.float32)
    out1 = jax.block_until_ready(
        classifier_net_forward(x1, flat_bf16, meta_bf16, block_batch=256))
    ref1 = classifier_net_reference(x1, params)
    assert out1.shape == (512, output_size)
    assert bool(jnp.all(jnp.abs(jnp.exp(out1).sum(axis=1) - 1.0) < 1e-4))
    assert bool(jnp.max(jnp.abs(out1 - ref1)) < 5e-2)   # bf16 matmul tolerance

    # ---- f32 path (matches PyTorch numerics); ragged tiny batch, single step --
    flat_f32, meta_f32 = prepare_classifier_params(params, compute_dtype=jnp.float32)
    x2 = jax.random.normal(k_x2, (13, input_size), jnp.float32)
    out2 = jax.block_until_ready(classifier_net_forward(x2, flat_f32, meta_f32))
    ref2 = classifier_net_reference(x2, params)
    assert out2.shape == (13, output_size)
    assert bool(jnp.all(jnp.abs(jnp.exp(out2).sum(axis=1) - 1.0) < 1e-4))
    assert bool(jnp.max(jnp.abs(out2 - ref2)) < 1e-3)

    print("KERNEL_OK")
</pallas_src>

<mosaic_0001>
module attributes {stable_mosaic.version = 11 : i64} {
  func.func @kernel(%arg0: i32, %arg1: memref<256x32xf32, #tpu.memory_space<vmem>>, %arg2: memref<32x128xbf16, #tpu.memory_space<vmem>>, %arg3: memref<1x128xf32, #tpu.memory_space<vmem>>, %arg4: memref<128x128xbf16, #tpu.memory_space<vmem>>, %arg5: memref<1x128xf32, #tpu.memory_space<vmem>>, %arg6: memref<128x128xbf16, #tpu.memory_space<vmem>>, %arg7: memref<1x128xf32, #tpu.memory_space<vmem>>, %arg8: memref<256x128xf32, #tpu.memory_space<vmem>>) attributes {dimension_semantics = [#tpu.dimension_semantics<parallel>], iteration_bounds = array<i64: 2>, scalar_prefetch = 0 : i64, scratch_operands = 0 : i64, tpu.core_type = #tpu.core_type<tc>, window_params = [{transform_indices = @transform_0, window_bounds = array<i64: 256, 32>}, {pipeline_mode = #tpu.pipeline_mode<synchronous>, transform_indices = @transform_1, window_bounds = array<i64: 32, 128>}, {pipeline_mode = #tpu.pipeline_mode<synchronous>, transform_indices = @transform_2, window_bounds = array<i64: 1, 128>}, {pipeline_mode = #tpu.pipeline_mode<synchronous>, transform_indices = @transform_3, window_bounds = array<i64: 128, 128>}, {pipeline_mode = #tpu.pipeline_mode<synchronous>, transform_indices = @transform_4, window_bounds = array<i64: 1, 128>}, {pipeline_mode = #tpu.pipeline_mode<synchronous>, transform_indices = @transform_5, window_bounds = array<i64: 128, 128>}, {pipeline_mode = #tpu.pipeline_mode<synchronous>, transform_indices = @transform_6, window_bounds = array<i64: 1, 128>}, {transform_indices = @transform_7, window_bounds = array<i64: 256, 128>}]} {
    %c0 = arith.constant 0 : index
    %c0_0 = arith.constant 0 : index
    %0 = vector.load %arg1[%c0, %c0_0] : memref<256x32xf32, #tpu.memory_space<vmem>>, vector<256x32xf32>
    %1 = arith.truncf %0 : vector<256x32xf32> to vector<256x32xbf16>
    %c0_1 = arith.constant 0 : index
    %c0_2 = arith.constant 0 : index
    %2 = vector.load %arg2[%c0_1, %c0_2] : memref<32x128xbf16, #tpu.memory_space<vmem>>, vector<32x128xbf16>
    %cst = arith.constant dense<0.000000e+00> : vector<256x128xf32>
    %3 = tpu.matmul %1, %2, %cst {dimension_numbers = #tpu.dot_dimension_numbers<[1], [0], [0], [1], [0, 0, 1, 1], [], []>} : vector<256x32xbf16>, vector<32x128xbf16>, vector<256x128xf32> -> vector<256x128xf32>
    %c0_3 = arith.constant 0 : index
    %c0_4 = arith.constant 0 : index
    %4 = vector.load %arg3[%c0_3, %c0_4] : memref<1x128xf32, #tpu.memory_space<vmem>>, vector<1x128xf32>
    %5 = vector.broadcast %4 : vector<1x128xf32> to vector<256x128xf32>
    %6 = arith.addf %3, %5 : vector<256x128xf32>
    %cst_5 = arith.constant 0.000000e+00 : f32
    %7 = vector.broadcast %cst_5 : f32 to vector<256x128xf32>
    %8 = arith.maximumf %6, %7 : vector<256x128xf32>
    %9 = arith.truncf %8 : vector<256x128xf32> to vector<256x128xbf16>
    %c0_6 = arith.constant 0 : index
    %c0_7 = arith.constant 0 : index
    %10 = vector.load %arg4[%c0_6, %c0_7] : memref<128x128xbf16, #tpu.memory_space<vmem>>, vector<128x128xbf16>
    %cst_8 = arith.constant dense<0.000000e+00> : vector<256x128xf32>
    %11 = tpu.matmul %9, %10, %cst_8 {dimension_numbers = #tpu.dot_dimension_numbers<[1], [0], [0], [1], [0, 0, 1, 1], [], []>} : vector<256x128xbf16>, vector<128x128xbf16>, vector<256x128xf32> -> vector<256x128xf32>
    %c0_9 = arith.constant 0 : index
    %c0_10 = arith.constant 0 : index
    %12 = vector.load %arg5[%c0_9, %c0_10] : memref<1x128xf32, #tpu.memory_space<vmem>>, vector<1x128xf32>
    %13 = vector.broadcast %12 : vector<1x128xf32> to vector<256x128xf32>
    %14 = arith.addf %11, %13 : vector<256x128xf32>
    %cst_11 = arith.constant 0.000000e+00 : f32
    %15 = vector.broadcast %cst_11 : f32 to vector<256x128xf32>
    %16 = arith.maximumf %14, %15 : vector<256x128xf32>
    %17 = arith.truncf %16 : vector<256x128xf32> to vector<256x128xbf16>
    %c0_12 = arith.constant 0 : index
    %c0_13 = arith.constant 0 : index
    %18 = vector.load %arg6[%c0_12, %c0_13] : memref<128x128xbf16, #tpu.memory_space<vmem>>, vector<128x128xbf16>
    %cst_14 = arith.constant dense<0.000000e+00> : vector<256x128xf32>
    %19 = tpu.matmul %17, %18, %cst_14 {dimension_numbers = #tpu.dot_dimension_numbers<[1], [0], [0], [1], [0, 0, 1, 1], [], []>} : vector<256x128xbf16>, vector<128x128xbf16>, vector<256x128xf32> -> vector<256x128xf32>
    %c0_15 = arith.constant 0 : index
    %c0_16 = arith.constant 0 : index
    %20 = vector.load %arg7[%c0_15, %c0_16] : memref<1x128xf32, #tpu.memory_space<vmem>>, vector<1x128xf32>
    %21 = vector.broadcast %20 : vector<1x128xf32> to vector<256x128xf32>
    %22 = arith.addf %19, %21 : vector<256x128xf32>
    %cst_17 = arith.constant dense<0xFF800000> : vector<256xf32>
    %23 = vector.multi_reduction <maximumf>, %22, %cst_17 [1] : vector<256x128xf32> to vector<256xf32>
    %24 = vector.shape_cast %23 : vector<256xf32> to vector<256x1xf32>
    %25 = vector.broadcast %24 : vector<256x1xf32> to vector<256x128xf32>
    %26 = arith.subf %22, %25 : vector<256x128xf32>
    %27 = math.exp %26 : vector<256x128xf32>
    %cst_18 = arith.constant dense<0.000000e+00> : vector<256xf32>
    %28 = vector.multi_reduction <add>, %27, %cst_18 [1] : vector<256x128xf32> to vector<256xf32>
    %29 = vector.shape_cast %28 : vector<256xf32> to vector<256x1xf32>
    %30 = math.log %29 : vector<256x1xf32>
    %31 = vector.broadcast %30 : vector<256x1xf32> to vector<256x128xf32>
    %32 = arith.subf %26, %31 : vector<256x128xf32>
    %c0_19 = arith.constant 0 : index
    %c0_20 = arith.constant 0 : index
    %33 = vector.load %arg8[%c0_19, %c0_20] : memref<256x128xf32, #tpu.memory_space<vmem>>, vector<256x128xf32>
    tpu.vector_store %arg8[%c0_19, %c0_20], %32 {strides = array<i32>} : memref<256x128xf32, #tpu.memory_space<vmem>>, vector<256x128xf32>,
    return
  }
  func.func @transform_0(%arg0: i32) -> (i32, i32) {
    %c0_i32 = arith.constant 0 : i32
    %c0_i32_0 = arith.constant 0 : i32
    return %arg0, %c0_i32 : i32, i32
  }
  func.func @transform_1(%arg0: i32) -> (i32, i32) {
    %c0_i32 = arith.constant 0 : i32
    %c0_i32_0 = arith.constant 0 : i32
    %c0_i32_1 = arith.constant 0 : i32
    return %c0_i32, %c0_i32_0 : i32, i32
  }
  func.func @transform_2(%arg0: i32) -> (i32, i32) {
    %c0_i32 = arith.constant 0 : i32
    %c0_i32_0 = arith.constant 0 : i32
    %c0_i32_1 = arith.constant 0 : i32
    return %c0_i32, %c0_i32_0 : i32, i32
  }
  func.func @transform_3(%arg0: i32) -> (i32, i32) {
    %c0_i32 = arith.constant 0 : i32
    %c0_i32_0 = arith.constant 0 : i32
    %c0_i32_1 = arith.constant 0 : i32
    return %c0_i32, %c0_i32_0 : i32, i32
  }
  func.func @transform_4(%arg0: i32) -> (i32, i32) {
    %c0_i32 = arith.constant 0 : i32
    %c0_i32_0 = arith.constant 0 : i32
    %c0_i32_1 = arith.constant 0 : i32
    return %c0_i32, %c0_i32_0 : i32, i32
  }
  func.func @transform_5(%arg0: i32) -> (i32, i32) {
    %c0_i32 = arith.constant 0 : i32
    %c0_i32_0 = arith.constant 0 : i32
    %c0_i32_1 = arith.constant 0 : i32
    return %c0_i32, %c0_i32_0 : i32, i32
  }
  func.func @transform_6(%arg0: i32) -> (i32, i32) {
    %c0_i32 = arith.constant 0 : i32
    %c0_i32_0 = arith.constant 0 : i32
    %c0_i32_1 = arith.constant 0 : i32
    return %c0_i32, %c0_i32_0 : i32, i32
  }
  func.func @transform_7(%arg0: i32) -> (i32, i32) {
    %c0_i32 = arith.constant 0 : i32
    %c0_i32_0 = arith.constant 0 : i32
    return %arg0, %c0_i32 : i32, i32
  }
}

</mosaic_0001>

<llo_original>
// kernel: tpu_custom_call.1
$region0: #{tpu_custom_call.1}
  #allocation0 [shape = 'u32[]', space=smem, size = 0x4, offset = 0x4, fixed_abs, tag = 'smem constant byte address 0x4 - core index']
  #allocation1 [shape = 'u32[144,128]{1,0:T(1,128)}', space=vmem, size = 0x12000, scoped, tag = 'internal scratch']
  %s0 = inlined_call_operand.vmem [shape: f32[512,32], index: 0, kind: input, shape index: {}]
  %s1 = inlined_call_operand.vmem [shape: bf16[32,128], index: 1, kind: input, shape index: {}]
  %s2 = inlined_call_operand.vmem [shape: f32[1,128], index: 2, kind: input, shape index: {}]
  %s3 = inlined_call_operand.vmem [shape: bf16[128,128], index: 3, kind: input, shape index: {}]
  %s4 = inlined_call_operand.vmem [shape: f32[1,128], index: 4, kind: input, shape index: {}]
  %s5 = inlined_call_operand.vmem [shape: bf16[128,128], index: 5, kind: input, shape index: {}]
  %s6 = inlined_call_operand.vmem [shape: f32[1,128], index: 6, kind: input, shape index: {}]
  %s7 = inlined_call_operand.hbm [shape: f32[512,128], index: 7, kind: output, shape index: {}]
  %s8 = sld [smem:[#allocation0]]
  $region61: #{tpu_custom_call.1} parent=0
    _
  %s10 = ssub.s32 1, %s8
  %s11 = scalar_select 0, %s10, %s8
  $region1: #{tpu_custom_call.1} parent=0
    #allocation2 [shape = 'u8[262144]{0}', space=vmem, size = 0x40000, scoped, tag = 'output window, operand 0']
    #allocation3 [shape = 's32[2]{0}', space=sflag, size = 0x8, scoped, tag = 'scoped memory for tpu_custom_call.1']
    %12 = vsyncpa [#allocation3], 0
    %s13 = scalar_lea.sflag [#allocation3], 1
    %14 = vsyncpa %s13, 0
    loop: start=0, step=1, limit=4
    $region2: #{tpu_custom_call.1} parent=1 // loop_pre_header
      _
    $region3: #{tpu_custom_call.1} parent=1 // loop_header
      %s16 = sphi 0, %s20
      %p17 = scmp.ge.s32.totalorder %s16, 4
      %s26 = sphi 0, %s28
      %s29 = sphi 0, %s26
      %s30 = sphi 0, %s29
      %s46 = sphi 0, %s30
      %s50 = sphi 0, %s50
      %s52 = sphi 0, %s50
      %s53 = sphi 0, %s52
      %s67 = sphi 0, %s53
      %s71 = sphi 0, %s71
      %s73 = sphi 0, %s71
      %s74 = sphi 0, %s73
      %s88 = sphi 0, %s74
      %s92 = sphi 0, %s92
      %s94 = sphi 0, %s92
      %s95 = sphi 0, %s94
      %s109 = sphi 0, %s95
      %s113 = sphi 0, %s113
      %s115 = sphi 0, %s113
      %s116 = sphi 0, %s115
      %s130 = sphi 0, %s116
      %s134 = sphi 0, %s134
      %s136 = sphi 0, %s134
      %s137 = sphi 0, %s136
      %s151 = sphi 0, %s137
      %s155 = sphi 0, %s155
      %s157 = sphi 0, %s155
      %s158 = sphi 0, %s157
      %s172 = sphi 0, %s158
      %s178 = sphi 0, %s180
      %s181 = sphi 0, %s178
      %s182 = sphi 0, %s181
      %s198 = sphi 0, %s182
    $region4: #{tpu_custom_call.1} parent=1 // loop_header_branch
      %19 = sbr.rel (%p17) target = $region8
    $region5: #{tpu_custom_call.1} parent=1 // loop_body
      %s21 = ssub.s32 %s16, 1
      %s22 = ssub.s32 %s16, 2
      %s23 = sadd.s32 %s16, 1
      %s24 = ssub.s32 %s16, %s23
      %p25 = scmp.eq.s32.totalorder %s24, 0
      %s27 = sadd.s32 %s26, 1
      %s28 = scalar_select %p25, %s26, %s27
      %p31 = pneg %p25
      %p32 = scmp.eq.s32.totalorder %s16, 1
      %p33 = por %p31, %p32
      %p34 = scmp.ne.s32.totalorder %s26, %s29
      %p35 = scmp.eq.s32.totalorder %s16, 0
      %p36 = por %p34, %p35
      %p37 = scmp.ne.s32.totalorder %s26, %s29
      %p38 = scmp.eq.s32.totalorder %s21, 1
      %p39 = por %p37, %p38
      %p40 = scmp.ne.s32.totalorder %s29, %s30
      %p41 = scmp.eq.s32.totalorder %s21, 0
      %p42 = por %p40, %p41
      %p43 = scmp.ne.s32.totalorder %s29, %s30
      %p44 = scmp.eq.s32.totalorder %s22, 1
      %p45 = por %p43, %p44
      %p47 = scmp.ne.s32.totalorder %s30, %s46
      %p48 = scmp.eq.s32.totalorder %s22, 0
      %p49 = por %p47, %p48
      %s51 = sadd.s32 %s50, 1
      %p54 = scmp.eq.s32.totalorder %s16, 1
      %p55 = scmp.ne.s32.totalorder %s50, %s52
      %p56 = scmp.eq.s32.totalorder %s16, 0
      %p57 = por %p55, %p56
      %p58 = scmp.ne.s32.totalorder %s50, %s52
      %p59 = scmp.eq.s32.totalorder %s21, 1
      %p60 = por %p58, %p59
      %p61 = scmp.ne.s32.totalorder %s52, %s53
      %p62 = scmp.eq.s32.totalorder %s21, 0
      %p63 = por %p61, %p62
      %p64 = scmp.ne.s32.totalorder %s52, %s53
      %p65 = scmp.eq.s32.totalorder %s22, 1
      %p66 = por %p64, %p65
      %p68 = scmp.ne.s32.totalorder %s53, %s67
      %p69 = scmp.eq.s32.totalorder %s22, 0
      %p70 = por %p68, %p69
      %s72 = sadd.s32 %s71, 1
      %p75 = scmp.eq.s32.totalorder %s16, 1
      %p76 = scmp.ne.s32.totalorder %s71, %s73
      %p77 = scmp.eq.s32.totalorder %s16, 0
      %p78 = por %p76, %p77
      %p79 = scmp.ne.s32.totalorder %s71, %s73
      %p80 = scmp.eq.s32.totalorder %s21, 1
      %p81 = por %p79, %p80
      %p82 = scmp.ne.s32.totalorder %s73, %s74
      %p83 = scmp.eq.s32.totalorder %s21, 0
      %p84 = por %p82, %p83
      %p85 = scmp.ne.s32.totalorder %s73, %s74
      %p86 = scmp.eq.s32.totalorder %s22, 1
      %p87 = por %p85, %p86
      %p89 = scmp.ne.s32.totalorder %s74, %s88
      %p90 = scmp.eq.s32.totalorder %s22, 0
      %p91 = por %p89, %p90
      %s93 = sadd.s32 %s92, 1
      %p96 = scmp.eq.s32.totalorder %s16, 1
      %p97 = scmp.ne.s32.totalorder %s92, %s94
      %p98 = scmp.eq.s32.totalorder %s16, 0
      %p99 = por %p97, %p98
      %p100 = scmp.ne.s32.totalorder %s92, %s94
      %p101 = scmp.eq.s32.totalorder %s21, 1
      %p102 = por %p100, %p101
      %p103 = scmp.ne.s32.totalorder %s94, %s95
      %p104 = scmp.eq.s32.totalorder %s21, 0
      %p105 = por %p103, %p104
      %p106 = scmp.ne.s32.totalorder %s94, %s95
      %p107 = scmp.eq.s32.totalorder %s22, 1
      %p108 = por %p106, %p107
      %p110 = scmp.ne.s32.totalorder %s95, %s109
      %p111 = scmp.eq.s32.totalorder %s22, 0
      %p112 = por %p110, %p111
      %s114 = sadd.s32 %s113, 1
      %p117 = scmp.eq.s32.totalorder %s16, 1
      %p118 = scmp.ne.s32.totalorder %s113, %s115
      %p119 = scmp.eq.s32.totalorder %s16, 0
      %p120 = por %p118, %p119
      %p121 = scmp.ne.s32.totalorder %s113, %s115
      %p122 = scmp.eq.s32.totalorder %s21, 1
      %p123 = por %p121, %p122
      %p124 = scmp.ne.s32.totalorder %s115, %s116
      %p125 = scmp.eq.s32.totalorder %s21, 0
      %p126 = por %p124, %p125
      %p127 = scmp.ne.s32.totalorder %s115, %s116
      %p128 = scmp.eq.s32.totalorder %s22, 1
      %p129 = por %p127, %p128
      %p131 = scmp.ne.s32.totalorder %s116, %s130
      %p132 = scmp.eq.s32.totalorder %s22, 0
      %p133 = por %p131, %p132
      %s135 = sadd.s32 %s134, 1
      %p138 = scmp.eq.s32.totalorder %s16, 1
      %p139 = scmp.ne.s32.totalorder %s134, %s136
      %p140 = scmp.eq.s32.totalorder %s16, 0
      %p141 = por %p139, %p140
      %p142 = scmp.ne.s32.totalorder %s134, %s136
      %p143 = scmp.eq.s32.totalorder %s21, 1
      %p144 = por %p142, %p143
      %p145 = scmp.ne.s32.totalorder %s136, %s137
      %p146 = scmp.eq.s32.totalorder %s21, 0
      %p147 = por %p145, %p146
      %p148 = scmp.ne.s32.totalorder %s136, %s137
      %p149 = scmp.eq.s32.totalorder %s22, 1
      %p150 = por %p148, %p149
      %p152 = scmp.ne.s32.totalorder %s137, %s151
      %p153 = scmp.eq.s32.totalorder %s22, 0
      %p154 = por %p152, %p153
      %s156 = sadd.s32 %s155, 1
      %p159 = scmp.eq.s32.totalorder %s16, 1
      %p160 = scmp.ne.s32.totalorder %s155, %s157
      %p161 = scmp.eq.s32.totalorder %s16, 0
      %p162 = por %p160, %p161
      %p163 = scmp.ne.s32.totalorder %s155, %s157
      %p164 = scmp.eq.s32.totalorder %s21, 1
      %p165 = por %p163, %p164
      %p166 = scmp.ne.s32.totalorder %s157, %s158
      %p167 = scmp.eq.s32.totalorder %s21, 0
      %p168 = por %p166, %p167
      %p169 = scmp.ne.s32.totalorder %s157, %s158
      %p170 = scmp.eq.s32.totalorder %s22, 1
      %p171 = por %p169, %p170
      %p173 = scmp.ne.s32.totalorder %s158, %s172
      %p174 = scmp.eq.s32.totalorder %s22, 0
      %p175 = por %p173, %p174
      %s176 = ssub.s32 %s16, %s23
      %p177 = scmp.eq.s32.totalorder %s176, 0
      %s179 = sadd.s32 %s178, 1
      %s180 = scalar_select %p177, %s178, %s179
      %p183 = pneg %p177
      %p184 = scmp.eq.s32.totalorder %s16, 1
      %p185 = por %p183, %p184
      %p186 = scmp.ne.s32.totalorder %s178, %s181
      %p187 = scmp.eq.s32.totalorder %s16, 0
      %p188 = por %p186, %p187
      %p189 = scmp.ne.s32.totalorder %s178, %s181
      %p190 = scmp.eq.s32.totalorder %s21, 1
      %p191 = por %p189, %p190
      %p192 = scmp.ne.s32.totalorder %s181, %s182
      %p193 = scmp.eq.s32.totalorder %s21, 0
      %p194 = por %p192, %p193
      %p195 = scmp.ne.s32.totalorder %s181, %s182
      %p196 = scmp.eq.s32.totalorder %s22, 1
      %p197 = por %p195, %p196
      %p199 = scmp.ne.s32.totalorder %s182, %s198
      %p200 = scmp.eq.s32.totalorder %s22, 0
      %p201 = por %p199, %p200
      %p202 = scmp.le.s32.totalorder 1, %s16
      %p203 = scmp.lt.s32.totalorder %s16, 3
      %p204 = pnand %p202, %p203
      %p205 = pneg %p204
      // Predicated region
      $region9: #{tpu_custom_call.1} parent=5 // pred_check
        _
      $region10: #{tpu_custom_call.1} parent=5 // pred_check_branch
        %207 = sbr.rel (%p204) target = $region12
      $region11: #{tpu_custom_call.1} parent=5 // pred_region
        %s208 = ssub.s32 %s16, 1
        // Predicated region
        $region13: #{tpu_custom_call.1} parent=11 // pred_check
          %p209 = pneg %p63
        $region14: #{tpu_custom_call.1} parent=11 // pred_check_branch
          %211 = sbr.rel (%p209) target = $region16
        $region15: #{tpu_custom_call.1} parent=11 // pred_region
          _
        $region16: #{tpu_custom_call.1} parent=11 // pred_fallthru
          _
        // Predicated region
        $region17: #{tpu_custom_call.1} parent=11 // pred_check
          %p212 = pneg %p84
        $region18: #{tpu_custom_call.1} parent=11 // pred_check_branch
          %214 = sbr.rel (%p212) target = $region20
        $region19: #{tpu_custom_call.1} parent=11 // pred_region
          _
        $region20: #{tpu_custom_call.1} parent=11 // pred_fallthru
          _
        // Predicated region
        $region21: #{tpu_custom_call.1} parent=11 // pred_check
          %p215 = pneg %p105
        $region22: #{tpu_custom_call.1} parent=11 // pred_check_branch
          %217 = sbr.rel (%p215) target = $region24
        $region23: #{tpu_custom_call.1} parent=11 // pred_region
          _
        $region24: #{tpu_custom_call.1} parent=11 // pred_fallthru
          _
        // Predicated region
        $region25: #{tpu_custom_call.1} parent=11 // pred_check
          %p218 = pneg %p126
        $region26: #{tpu_custom_call.1} parent=11 // pred_check_branch
          %220 = sbr.rel (%p218) target = $region28
        $region27: #{tpu_custom_call.1} parent=11 // pred_region
          _
        $region28: #{tpu_custom_call.1} parent=11 // pred_fallthru
          _
        // Predicated region
        $region29: #{tpu_custom_call.1} parent=11 // pred_check
          %p221 = pneg %p147
        $region30: #{tpu_custom_call.1} parent=11 // pred_check_branch
          %223 = sbr.rel (%p221) target = $region32
        $region31: #{tpu_custom_call.1} parent=11 // pred_region
          _
        $region32: #{tpu_custom_call.1} parent=11 // pred_fallthru
          _
        // Predicated region
        $region33: #{tpu_custom_call.1} parent=11 // pred_check
          %p224 = pneg %p168
        $region34: #{tpu_custom_call.1} parent=11 // pred_check_branch
          %226 = sbr.rel (%p224) target = $region36
        $region35: #{tpu_custom_call.1} parent=11 // pred_region
          _
        $region36: #{tpu_custom_call.1} parent=11 // pred_fallthru
          _
      $region12: #{tpu_custom_call.1} parent=5 // pred_fallthru
        _
      %p227 = scmp.lt.s32.totalorder %s16, 2
      // Predicated region
      $region37: #{tpu_custom_call.1} parent=5 // pred_check
        %p228 = pneg %p227
      $region38: #{tpu_custom_call.1} parent=5 // pred_check_branch
        %230 = sbr.rel (%p228) target = $region40
      $region39: #{tpu_custom_call.1} parent=5 // pred_region
        // Predicated region
        $region41: #{tpu_custom_call.1} parent=39 // pred_check
          %p231 = pneg %p36
        $region42: #{tpu_custom_call.1} parent=39 // pred_check_branch
          %233 = sbr.rel (%p231) target = $region44
        $region43: #{tpu_custom_call.1} parent=39 // pred_region
          %s234 = smul.u32 32, %s16
          %p235 = scmp.lt.s32.totalorder %s234, 63
          %s236 = scalar_select %p235, %s234, 63
          %s237 = smul.addr %s236, 8
          %s238 = scalar_lea.vmem %s0, %s237
          %s239 = smul.u32 32, %s16
        $region44: #{tpu_custom_call.1} parent=39 // pred_fallthru
          _
      $region40: #{tpu_custom_call.1} parent=5 // pred_fallthru
        _
      %p240 = scmp.le.s32.totalorder 1, %s16
      %p241 = scmp.lt.s32.totalorder %s16, 3
      %p242 = pnand %p240, %p241
      %p243 = pneg %p242
      // Predicated region
      $region45: #{tpu_custom_call.1} parent=5 // pred_check
        _
      $region46: #{tpu_custom_call.1} parent=5 // pred_check_branch
        %245 = sbr.rel (%p242) target = $region48
      $region47: #{tpu_custom_call.1} parent=5 // pred_region
        %s246 = ssub.s32 %s16, 1
        %s247 = smul.u32 32, %s21
        %p248 = scmp.lt.s32.totalorder %s247, 63
        %s249 = scalar_select %p248, %s247, 63
        %s250 = smul.addr %s249, 8
        %s251 = scalar_lea.vmem %s0, %s250
        %p252 = pneg %p42
        %p253 = pneg %p39
        %p254 = pneg %p63
        %p255 = pneg %p60
        %p256 = pneg %p84
        %p257 = pneg %p81
        %p258 = pneg %p105
        %p259 = pneg %p102
        %p260 = pneg %p126
        %p261 = pneg %p123
        %p262 = pneg %p147
        %p263 = pneg %p144
        %p264 = pneg %p168
        %p265 = pneg %p165
        %p266 = pneg %p194
        %p267 = pneg %p191
        %s268 = sand.u32 %s181, 1
        %s269 = scalar_lea.sflag [#allocation3], %s268
        %s270 = sand.u32 %s181, 1
        %s271 = smul.addr %s270, 256
        %s272 = scalar_lea.vmem [#allocation2], %s271
        %s273 = smul.u32 32, %s21
        %p274 = scmp.lt.s32.totalorder %s273, 63
        %s275 = scalar_select %p274, %s273, 63
        %s276 = smul.addr %s275, 8
        %s277 = scalar_lea.vmem %s0, %s276
        %s278 = smul.u32 32, %s21
        %s279 = smul.u32 32, %s21
        %v281 = vld [vmem:[%s277] sm:$0xff]
        %v282 = vld [vmem:[%s277 + $0x8] sm:$0xff]
        %v283 = vld [vmem:[%s277 + $0x10] sm:$0xff]
        %v284 = vld [vmem:[%s277 + $0x18] sm:$0xff]
        %v285 = vld [vmem:[%s277 + $0x20] sm:$0xff]
        %v286 = vld [vmem:[%s277 + $0x28] sm:$0xff]
        %v287 = vld [vmem:[%s277 + $0x30] sm:$0xff]
        %v288 = vld [vmem:[%s277 + $0x38] sm:$0xff]
        %v289 = vld [vmem:[%s277 + $0x40] sm:$0xff]
        %v290 = vld [vmem:[%s277 + $0x48] sm:$0xff]
        %v291 = vld [vmem:[%s277 + $0x50] sm:$0xff]
        %v292 = vld [vmem:[%s277 + $0x58] sm:$0xff]
        %v293 = vld [vmem:[%s277 + $0x60] sm:$0xff]
        %v294 = vld [vmem:[%s277 + $0x68] sm:$0xff]
        %v295 = vld [vmem:[%s277 + $0x70] sm:$0xff]
        %v296 = vld [vmem:[%s277 + $0x78] sm:$0xff]
        %v297 = vld [vmem:[%s277 + $0x80] sm:$0xff]
        %v298 = vld [vmem:[%s277 + $0x88] sm:$0xff]
        %v299 = vld [vmem:[%s277 + $0x90] sm:$0xff]
        %v300 = vld [vmem:[%s277 + $0x98] sm:$0xff]
        %v301 = vld [vmem:[%s277 + $0xa0] sm:$0xff]
        %v302 = vld [vmem:[%s277 + $0xa8] sm:$0xff]
        %v303 = vld [vmem:[%s277 + $0xb0] sm:$0xff]
        %v304 = vld [vmem:[%s277 + $0xb8] sm:$0xff]
        %v305 = vld [vmem:[%s277 + $0xc0] sm:$0xff]
        %v306 = vld [vmem:[%s277 + $0xc8] sm:$0xff]
        %v307 = vld [vmem:[%s277 + $0xd0] sm:$0xff]
        %v308 = vld [vmem:[%s277 + $0xd8] sm:$0xff]
        %v309 = vld [vmem:[%s277 + $0xe0] sm:$0xff]
        %v310 = vld [vmem:[%s277 + $0xe8] sm:$0xff]
        %v311 = vld [vmem:[%s277 + $0xf0] sm:$0xff]
        %v312 = vld [vmem:[%s277 + $0xf8] sm:$0xff]
        %v313 = vpack.c.bf16 %v282, %v281
        %v314 = vpack.c.bf16 %v284, %v283
        %v315 = vpack.c.bf16 %v286, %v285
        %v316 = vpack.c.bf16 %v288, %v287
        %v317 = vpack.c.bf16 %v290, %v289
        %v318 = vpack.c.bf16 %v292, %v291
        %v319 = vpack.c.bf16 %v294, %v293
        %v320 = vpack.c.bf16 %v296, %v295
        %v321 = vpack.c.bf16 %v298, %v297
        %v322 = vpack.c.bf16 %v300, %v299
        %v323 = vpack.c.bf16 %v302, %v301
        %v324 = vpack.c.bf16 %v304, %v303
        %v325 = vpack.c.bf16 %v306, %v305
        %v326 = vpack.c.bf16 %v308, %v307
        %v327 = vpack.c.bf16 %v310, %v309
        %v328 = vpack.c.bf16 %v312, %v311
        %v329 = vld [vmem:[%s1] sm:$0xf]
        %v330 = vld [vmem:[%s1 + $0x4] sm:$0xf]
        %v331 = vld [vmem:[%s1 + $0x8] sm:$0xf]
        %v332 = vld [vmem:[%s1 + $0xc] sm:$0xf]
        %v333 = vld [vmem:[%s2] sm:$0x1]
        %v335 = vlaneseq
        %v336 = vshrl.u32 %v335, 7
        %v337 = vsub.s32 0, %v336
        %v338 = vrot.slane %v333, %v337
        %v344 = vunpack.c.l.b16 %v329
        %v345 = vunpack.c.l.b16 %v330
        %v346 = vunpack.c.l.b16 %v331
        %v347 = vunpack.c.l.b16 %v332
        %v348 = vpack.c.b16 %v345, %v344
        %v349 = vpack.c.b16 %v347, %v346
        %vm352 = vcmask 261120
        %v354 = vsel %vm352, %v313, 0
        %v357 = vsel %vm352, %v314, 0
        %v360 = vsel %vm352, %v315, 0
        %v363 = vsel %vm352, %v316, 0
        %v366 = vsel %vm352, %v317, 0
        %v369 = vsel %vm352, %v318, 0
        %v372 = vsel %vm352, %v319, 0
        %v375 = vsel %vm352, %v320, 0
        %v378 = vsel %vm352, %v321, 0
        %v381 = vsel %vm352, %v322, 0
        %v384 = vsel %vm352, %v323, 0
        %v387 = vsel %vm352, %v324, 0
        %v390 = vsel %vm352, %v325, 0
        %v393 = vsel %vm352, %v326, 0
        %v396 = vsel %vm352, %v327, 0
        %v399 = vsel %vm352, %v328, 0
        %401 = vmatprep.subr.bf16.mxu0 0
        %402 = vmatpush1.bf16.msra.mxu0 %v348
        %403 = vmatprep.subr.bf16.mxu0 0
        %404 = vmatpush1.bf16.msra.mxu0 %v349
        %405 = vmatprep.subr.bf16.mxu0 0
        %406 = vmatpush1.bf16.msra.mxu0 0
        %407 = vmatprep.subr.bf16.mxu0 0
        %408 = vmatpush1.bf16.msra.mxu0 0
        %409 = vmatprep.subr.bf16.mxu0 0
        %410 = vmatpush1.bf16.msra.mxu0 0
        %411 = vmatprep.subr.bf16.mxu0 0
        %412 = vmatpush1.bf16.msra.mxu0 0
        %413 = vmatprep.subr.bf16.mxu0 0
        %414 = vmatpush1.bf16.msra.mxu0 0
        %415 = vmatprep.subr.bf16.mxu0 0
        %416 = vmatpush1.bf16.msra.mxu0 0
        %417 = vmatprep.subr.bf16.mxu0 0
        %418 = vmatpush1.bf16.msra.mxu0 0
        %419 = vmatprep.subr.bf16.mxu0 0
        %420 = vmatpush1.bf16.msra.mxu0 0
        %421 = vmatprep.subr.bf16.mxu0 0
        %422 = vmatpush1.bf16.msra.mxu0 0
        %423 = vmatprep.subr.bf16.mxu0 0
        %424 = vmatpush1.bf16.msra.mxu0 0
        %425 = vmatprep.subr.bf16.mxu0 0
        %426 = vmatpush1.bf16.msra.mxu0 0
        %427 = vmatprep.subr.bf16.mxu0 0
        %428 = vmatpush1.bf16.msra.mxu0 0
        %429 = vmatprep.subr.bf16.mxu0 0
        %430 = vmatpush1.bf16.msra.mxu0 0
        %431 = vmatprep.subr.bf16.mxu0 0
        %432 = vmatpush1.bf16.msra.mxu0 0
        %433 = vmatprep.mubr.bf16.mxu0 0
        %434 = vmatmul.mubr.bf16.gmra.mrb[0].mxu0 %v354
        %v435 = vpop.f32.mrb[0].mxu0
        %v436 = vadd.f32 %v338, %v435
        %v437 = vpop.f32.mrb[0].mxu0
        %v438 = vpop.f32.mrb[0].mxu0
        %v439 = vadd.f32 %v338, %v438
        %v440 = vpop.f32.mrb[0].mxu0
        %441 = vmatprep.mubr.bf16.mxu0 0
        %442 = vmatmul.mubr.bf16.gmra.mrb[0].mxu0 %v357
        %v443 = vpop.f32.mrb[0].mxu0
        %v444 = vadd.f32 %v338, %v443
        %v445 = vpop.f32.mrb[0].mxu0
        %v446 = vpop.f32.mrb[0].mxu0
        %v447 = vadd.f32 %v338, %v446
        %v448 = vpop.f32.mrb[0].mxu0
        %449 = vmatprep.mubr.bf16.mxu0 0
        %450 = vmatmul.mubr.bf16.gmra.mrb[0].mxu0 %v360
        %v451 = vpop.f32.mrb[0].mxu0
        %v452 = vadd.f32 %v338, %v451
        %v453 = vpop.f32.mrb[0].mxu0
        %v454 = vpop.f32.mrb[0].mxu0
        %v455 = vadd.f32 %v338, %v454
        %v456 = vpop.f32.mrb[0].mxu0
        %457 = vmatprep.mubr.bf16.mxu0 0
        %458 = vmatmul.mubr.bf16.gmra.mrb[0].mxu0 %v363
        %v459 = vpop.f32.mrb[0].mxu0
        %v460 = vadd.f32 %v338, %v459
        %v461 = vpop.f32.mrb[0].mxu0
        %v462 = vpop.f32.mrb[0].mxu0
        %v463 = vadd.f32 %v338, %v462
        %v464 = vpop.f32.mrb[0].mxu0
        %465 = vmatprep.mubr.bf16.mxu0 0
        %466 = vmatmul.mubr.bf16.gmra.mrb[0].mxu0 %v366
        %v467 = vpop.f32.mrb[0].mxu0
        %v468 = vadd.f32 %v338, %v467
        %v469 = vpop.f32.mrb[0].mxu0
        %v470 = vpop.f32.mrb[0].mxu0
        %v471 = vadd.f32 %v338, %v470
        %v472 = vpop.f32.mrb[0].mxu0
        %473 = vmatprep.mubr.bf16.mxu0 0
        %474 = vmatmul.mubr.bf16.gmra.mrb[0].mxu0 %v369
        %v475 = vpop.f32.mrb[0].mxu0
        %v476 = vadd.f32 %v338, %v475
        %v477 = vpop.f32.mrb[0].mxu0
        %v478 = vpop.f32.mrb[0].mxu0
        %v479 = vadd.f32 %v338, %v478
        %v480 = vpop.f32.mrb[0].mxu0
        %481 = vmatprep.mubr.bf16.mxu0 0
        %482 = vmatmul.mubr.bf16.gmra.mrb[0].mxu0 %v372
        %v483 = vpop.f32.mrb[0].mxu0
        %v484 = vadd.f32 %v338, %v483
        %v485 = vpop.f32.mrb[0].mxu0
        %v486 = vpop.f32.mrb[0].mxu0
        %v487 = vadd.f32 %v338, %v486
        %v488 = vpop.f32.mrb[0].mxu0
        %489 = vmatprep.mubr.bf16.mxu0 0
        %490 = vmatmul.mubr.bf16.gmra.mrb[0].mxu0 %v375
        %v491 = vpop.f32.mrb[0].mxu0
        %v492 = vadd.f32 %v338, %v491
        %v493 = vpop.f32.mrb[0].mxu0
        %v494 = vpop.f32.mrb[0].mxu0
        %v495 = vadd.f32 %v338, %v494
        %v496 = vpop.f32.mrb[0].mxu0
        %497 = vmatprep.mubr.bf16.mxu0 0
        %498 = vmatmul.mubr.bf16.gmra.mrb[0].mxu0 %v378
        %v499 = vpop.f32.mrb[0].mxu0
        %v500 = vadd.f32 %v338, %v499
        %v501 = vpop.f32.mrb[0].mxu0
        %v502 = vpop.f32.mrb[0].mxu0
        %v503 = vadd.f32 %v338, %v502
        %v504 = vpop.f32.mrb[0].mxu0
        %505 = vmatprep.mubr.bf16.mxu0 0
        %506 = vmatmul.mubr.bf16.gmra.mrb[0].mxu0 %v381
        %v507 = vpop.f32.mrb[0].mxu0
        %v508 = vadd.f32 %v338, %v507
        %v509 = vpop.f32.mrb[0].mxu0
        %v510 = vpop.f32.mrb[0].mxu0
        %v511 = vadd.f32 %v338, %v510
        %v512 = vpop.f32.mrb[0].mxu0
        %513 = vmatprep.mubr.bf16.mxu0 0
        %514 = vmatmul.mubr.bf16.gmra.mrb[0].mxu0 %v384
        %v515 = vpop.f32.mrb[0].mxu0
        %v516 = vadd.f32 %v338, %v515
        %v517 = vpop.f32.mrb[0].mxu0
        %v518 = vpop.f32.mrb[0].mxu0
        %v519 = vadd.f32 %v338, %v518
        %v520 = vpop.f32.mrb[0].mxu0
        %521 = vmatprep.mubr.bf16.mxu0 0
        %522 = vmatmul.mubr.bf16.gmra.mrb[0].mxu0 %v387
        %v523 = vpop.f32.mrb[0].mxu0
        %v524 = vadd.f32 %v338, %v523
        %v525 = vpop.f32.mrb[0].mxu0
        %v526 = vpop.f32.mrb[0].mxu0
        %v527 = vadd.f32 %v338, %v526
        %v528 = vpop.f32.mrb[0].mxu0
        %529 = vmatprep.mubr.bf16.mxu0 0
        %530 = vmatmul.mubr.bf16.gmra.mrb[0].mxu0 %v390
        %v531 = vpop.f32.mrb[0].mxu0
        %v532 = vadd.f32 %v338, %v531
        %v533 = vpop.f32.mrb[0].mxu0
        %v534 = vpop.f32.mrb[0].mxu0
        %v535 = vadd.f32 %v338, %v534
        %v536 = vpop.f32.mrb[0].mxu0
        %537 = vmatprep.mubr.bf16.mxu0 0
        %538 = vmatmul.mubr.bf16.gmra.mrb[0].mxu0 %v393
        %v539 = vpop.f32.mrb[0].mxu0
        %v540 = vadd.f32 %v338, %v539
        %v541 = vpop.f32.mrb[0].mxu0
        %v542 = vpop.f32.mrb[0].mxu0
        %v543 = vadd.f32 %v338, %v542
        %v544 = vpop.f32.mrb[0].mxu0
        %545 = vmatprep.mubr.bf16.mxu0 0
        %546 = vmatmul.mubr.bf16.gmra.mrb[0].mxu0 %v396
        %v547 = vpop.f32.mrb[0].mxu0
        %v548 = vadd.f32 %v338, %v547
        %v549 = vpop.f32.mrb[0].mxu0
        %v550 = vpop.f32.mrb[0].mxu0
        %v551 = vadd.f32 %v338, %v550
        %v552 = vpop.f32.mrb[0].mxu0
        %553 = vmatprep.mubr.bf16.mxu0 0
        %554 = vmatmul.mubr.bf16.gmra.mrb[0].mxu0 %v399
        %v555 = vpop.f32.mrb[0].mxu0
        %v556 = vadd.f32 %v338, %v555
        %v557 = vpop.f32.mrb[0].mxu0
        %v558 = vpop.f32.mrb[0].mxu0
        %v559 = vadd.f32 %v338, %v558
        %v560 = vpop.f32.mrb[0].mxu0
        %561 = vdwg.mxu0
        %v562 = vmax.f32 %v436, 0.0
        %v563 = vmax.f32 %v439, 0.0
        %v564 = vmax.f32 %v444, 0.0
        %v565 = vmax.f32 %v447, 0.0
        %v566 = vmax.f32 %v452, 0.0
        %v567 = vmax.f32 %v455, 0.0
        %v568 = vmax.f32 %v460, 0.0
        %v569 = vmax.f32 %v463, 0.0
        %v570 = vmax.f32 %v468, 0.0
        %v571 = vmax.f32 %v471, 0.0
        %v572 = vmax.f32 %v476, 0.0
        %v573 = vmax.f32 %v479, 0.0
        %v574 = vmax.f32 %v484, 0.0
        %v575 = vmax.f32 %v487, 0.0
        %v576 = vmax.f32 %v492, 0.0
        %v577 = vmax.f32 %v495, 0.0
        %v578 = vmax.f32 %v500, 0.0
        %v579 = vmax.f32 %v503, 0.0
        %v580 = vmax.f32 %v508, 0.0
        %v581 = vmax.f32 %v511, 0.0
        %v582 = vmax.f32 %v516, 0.0
        %v583 = vmax.f32 %v519, 0.0
        %v584 = vmax.f32 %v524, 0.0
        %v585 = vmax.f32 %v527, 0.0
        %v586 = vmax.f32 %v532, 0.0
        %v587 = vmax.f32 %v535, 0.0
        %v588 = vmax.f32 %v540, 0.0
        %v589 = vmax.f32 %v543, 0.0
        %v590 = vmax.f32 %v548, 0.0
        %v591 = vmax.f32 %v551, 0.0
        %v592 = vmax.f32 %v556, 0.0
        %v593 = vmax.f32 %v559, 0.0
        %v594 = vpack.c.bf16 %v563, %v562
        %v595 = vpack.c.bf16 %v565, %v564
        %v596 = vpack.c.bf16 %v567, %v566
        %v597 = vpack.c.bf16 %v569, %v568
        %v598 = vpack.c.bf16 %v571, %v570
        %v599 = vpack.c.bf16 %v573, %v572
        %v600 = vpack.c.bf16 %v575, %v574
        %v601 = vpack.c.bf16 %v577, %v576
        %v602 = vpack.c.bf16 %v579, %v578
        %v603 = vpack.c.bf16 %v581, %v580
        %v604 = vpack.c.bf16 %v583, %v582
        %v605 = vpack.c.bf16 %v585, %v584
        %v606 = vpack.c.bf16 %v587, %v586
        %v607 = vpack.c.bf16 %v589, %v588
        %v608 = vpack.c.bf16 %v591, %v590
        %v609 = vpack.c.bf16 %v593, %v592
        %v610 = vld [vmem:[%s3] sm:$0xf]
        %v611 = vld [vmem:[%s3 + $0x4] sm:$0xf]
        %v612 = vld [vmem:[%s3 + $0x8] sm:$0xf]
        %v613 = vld [vmem:[%s3 + $0xc] sm:$0xf]
        %v614 = vld [vmem:[%s3 + $0x10] sm:$0xf]
        %v615 = vld [vmem:[%s3 + $0x14] sm:$0xf]
        %v616 = vld [vmem:[%s3 + $0x18] sm:$0xf]
        %v617 = vld [vmem:[%s3 + $0x1c] sm:$0xf]
        %v618 = vld [vmem:[%s3 + $0x20] sm:$0xf]
        %v619 = vld [vmem:[%s3 + $0x24] sm:$0xf]
        %v620 = vld [vmem:[%s3 + $0x28] sm:$0xf]
        %v621 = vld [vmem:[%s3 + $0x2c] sm:$0xf]
        %v622 = vld [vmem:[%s3 + $0x30] sm:$0xf]
        %v623 = vld [vmem:[%s3 + $0x34] sm:$0xf]
        %v624 = vld [vmem:[%s3 + $0x38] sm:$0xf]
        %v625 = vld [vmem:[%s3 + $0x3c] sm:$0xf]
        %v626 = vld [vmem:[%s4] sm:$0x1]
        %v628 = vlaneseq
        %v629 = vshrl.u32 %v628, 7
        %v630 = vsub.s32 0, %v629
        %v631 = vrot.slane %v626, %v630
        %v649 = vunpack.c.l.b16 %v610
        %v650 = vunpack.c.l.b16 %v611
        %v651 = vunpack.c.l.b16 %v612
        %v652 = vunpack.c.l.b16 %v613
        %v653 = vunpack.c.l.b16 %v614
        %v654 = vunpack.c.l.b16 %v615
        %v655 = vunpack.c.l.b16 %v616
        %v656 = vunpack.c.l.b16 %v617
        %v657 = vunpack.c.l.b16 %v618
        %v658 = vunpack.c.l.b16 %v619
        %v659 = vunpack.c.l.b16 %v620
        %v660 = vunpack.c.l.b16 %v621
        %v661 = vunpack.c.l.b16 %v622
        %v662 = vunpack.c.l.b16 %v623
        %v663 = vunpack.c.l.b16 %v624
        %v664 = vunpack.c.l.b16 %v625
        %v665 = vpack.c.b16 %v650, %v649
        %v666 = vpack.c.b16 %v652, %v651
        %v667 = vpack.c.b16 %v654, %v653
        %v668 = vpack.c.b16 %v656, %v655
        %v669 = vpack.c.b16 %v658, %v657
        %v670 = vpack.c.b16 %v660, %v659
        %v671 = vpack.c.b16 %v662, %v661
        %v672 = vpack.c.b16 %v664, %v663
        %681 = vmatprep.subr.bf16.mxu0 0
        %682 = vmatpush1.bf16.msra.mxu0 %v665
        %683 = vmatprep.subr.bf16.mxu0 0
        %684 = vmatpush1.bf16.msra.mxu0 %v666
        %685 = vmatprep.subr.bf16.mxu0 0
        %686 = vmatpush1.bf16.msra.mxu0 %v667
        %687 = vmatprep.subr.bf16.mxu0 0
        %688 = vmatpush1.bf16.msra.mxu0 %v668
        %689 = vmatprep.subr.bf16.mxu0 0
        %690 = vmatpush1.bf16.msra.mxu0 %v669
        %691 = vmatprep.subr.bf16.mxu0 0
        %692 = vmatpush1.bf16.msra.mxu0 %v670
        %693 = vmatprep.subr.bf16.mxu0 0
        %694 = vmatpush1.bf16.msra.mxu0 %v671
        %695 = vmatprep.subr.bf16.mxu0 0
        %696 = vmatpush1.bf16.msra.mxu0 %v672
        %697 = vmatprep.subr.bf16.mxu0 0
        %698 = vmatpush1.bf16.msra.mxu0 0
        %699 = vmatprep.subr.bf16.mxu0 0
        %700 = vmatpush1.bf16.msra.mxu0 0
        %701 = vmatprep.subr.bf16.mxu0 0
        %702 = vmatpush1.bf16.msra.mxu0 0
        %703 = vmatprep.subr.bf16.mxu0 0
        %704 = vmatpush1.bf16.msra.mxu0 0
        %705 = vmatprep.subr.bf16.mxu0 0
        %706 = vmatpush1.bf16.msra.mxu0 0
        %707 = vmatprep.subr.bf16.mxu0 0
        %708 = vmatpush1.bf16.msra.mxu0 0
        %709 = vmatprep.subr.bf16.mxu0 0
        %710 = vmatpush1.bf16.msra.mxu0 0
        %711 = vmatprep.subr.bf16.mxu0 0
        %712 = vmatpush1.bf16.msra.mxu0 0
        %713 = vmatprep.mubr.bf16.mxu0 0
        %714 = vmatmul.mubr.bf16.gmra.mrb[0].mxu0 %v594
        %v715 = vpop.f32.mrb[0].mxu0
        %v716 = vadd.f32 %v631, %v715
        %v717 = vpop.f32.mrb[0].mxu0
        %v718 = vpop.f32.mrb[0].mxu0
        %v719 = vadd.f32 %v631, %v718
        %v720 = vpop.f32.mrb[0].mxu0
        %721 = vmatprep.mubr.bf16.mxu0 0
        %722 = vmatmul.mubr.bf16.gmra.mrb[0].mxu0 %v595
        %v723 = vpop.f32.mrb[0].mxu0
        %v724 = vadd.f32 %v631, %v723
        %v725 = vpop.f32.mrb[0].mxu0
        %v726 = vpop.f32.mrb[0].mxu0
        %v727 = vadd.f32 %v631, %v726
        %v728 = vpop.f32.mrb[0].mxu0
        %729 = vmatprep.mubr.bf16.mxu0 0
        %730 = vmatmul.mubr.bf16.gmra.mrb[0].mxu0 %v596
        %v731 = vpop.f32.mrb[0].mxu0
        %v732 = vadd.f32 %v631, %v731
        %v733 = vpop.f32.mrb[0].mxu0
        %v734 = vpop.f32.mrb[0].mxu0
        %v735 = vadd.f32 %v631, %v734
        %v736 = vpop.f32.mrb[0].mxu0
        %737 = vmatprep.mubr.bf16.mxu0 0
        %738 = vmatmul.mubr.bf16.gmra.mrb[0].mxu0 %v597
        %v739 = vpop.f32.mrb[0].mxu0
        %v740 = vadd.f32 %v631, %v739
        %v741 = vpop.f32.mrb[0].mxu0
        %v742 = vpop.f32.mrb[0].mxu0
        %v743 = vadd.f32 %v631, %v742
        %v744 = vpop.f32.mrb[0].mxu0
        %745 = vmatprep.mubr.bf16.mxu0 0
        %746 = vmatmul.mubr.bf16.gmra.mrb[0].mxu0 %v598
        %v747 = vpop.f32.mrb[0].mxu0
        %v748 = vadd.f32 %v631, %v747
        %v749 = vpop.f32.mrb[0].mxu0
        %v750 = vpop.f32.mrb[0].mxu0
        %v751 = vadd.f32 %v631, %v750
        %v752 = vpop.f32.mrb[0].mxu0
        %753 = vmatprep.mubr.bf16.mxu0 0
        %754 = vmatmul.mubr.bf16.gmra.mrb[0].mxu0 %v599
        %v755 = vpop.f32.mrb[0].mxu0
        %v756 = vadd.f32 %v631, %v755
        %v757 = vpop.f32.mrb[0].mxu0
        %v758 = vpop.f32.mrb[0].mxu0
        %v759 = vadd.f32 %v631, %v758
        %v760 = vpop.f32.mrb[0].mxu0
        %761 = vmatprep.mubr.bf16.mxu0 0
        %762 = vmatmul.mubr.bf16.gmra.mrb[0].mxu0 %v600
        %v763 = vpop.f32.mrb[0].mxu0
        %v764 = vadd.f32 %v631, %v763
        %v765 = vpop.f32.mrb[0].mxu0
        %v766 = vpop.f32.mrb[0].mxu0
        %v767 = vadd.f32 %v631, %v766
        %v768 = vpop.f32.mrb[0].mxu0
        %769 = vmatprep.mubr.bf16.mxu0 0
        %770 = vmatmul.mubr.bf16.gmra.mrb[0].mxu0 %v601
        %v771 = vpop.f32.mrb[0].mxu0
        %v772 = vadd.f32 %v631, %v771
        %v773 = vpop.f32.mrb[0].mxu0
        %v774 = vpop.f32.mrb[0].mxu0
        %v775 = vadd.f32 %v631, %v774
        %v776 = vpop.f32.mrb[0].mxu0
        %777 = vmatprep.mubr.bf16.mxu0 0
        %778 = vmatmul.mubr.bf16.gmra.mrb[0].mxu0 %v602
        %v779 = vpop.f32.mrb[0].mxu0
        %v780 = vadd.f32 %v631, %v779
        %v781 = vpop.f32.mrb[0].mxu0
        %v782 = vpop.f32.mrb[0].mxu0
        %v783 = vadd.f32 %v631, %v782
        %v784 = vpop.f32.mrb[0].mxu0
        %785 = vmatprep.mubr.bf16.mxu0 0
        %786 = vmatmul.mubr.bf16.gmra.mrb[0].mxu0 %v603
        %v787 = vpop.f32.mrb[0].mxu0
        %v788 = vadd.f32 %v631, %v787
        %v789 = vpop.f32.mrb[0].mxu0
        %v790 = vpop.f32.mrb[0].mxu0
        %v791 = vadd.f32 %v631, %v790
        %v792 = vpop.f32.mrb[0].mxu0
        %793 = vmatprep.mubr.bf16.mxu0 0
        %794 = vmatmul.mubr.bf16.gmra.mrb[0].mxu0 %v604
        %v795 = vpop.f32.mrb[0].mxu0
        %v796 = vadd.f32 %v631, %v795
        %v797 = vpop.f32.mrb[0].mxu0
        %v798 = vpop.f32.mrb[0].mxu0
        %v799 = vadd.f32 %v631, %v798
        %v800 = vpop.f32.mrb[0].mxu0
        %801 = vmatprep.mubr.bf16.mxu0 0
        %802 = vmatmul.mubr.bf16.gmra.mrb[0].mxu0 %v605
        %v803 = vpop.f32.mrb[0].mxu0
        %v804 = vadd.f32 %v631, %v803
        %v805 = vpop.f32.mrb[0].mxu0
        %v806 = vpop.f32.mrb[0].mxu0
        %v807 = vadd.f32 %v631, %v806
        %v808 = vpop.f32.mrb[0].mxu0
        %809 = vmatprep.mubr.bf16.mxu0 0
        %810 = vmatmul.mubr.bf16.gmra.mrb[0].mxu0 %v606
        %v811 = vpop.f32.mrb[0].mxu0
        %v812 = vadd.f32 %v631, %v811
        %v813 = vpop.f32.mrb[0].mxu0
        %v814 = vpop.f32.mrb[0].mxu0
        %v815 = vadd.f32 %v631, %v814
        %v816 = vpop.f32.mrb[0].mxu0
        %817 = vmatprep.mubr.bf16.mxu0 0
        %818 = vmatmul.mubr.bf16.gmra.mrb[0].mxu0 %v607
        %v819 = vpop.f32.mrb[0].mxu0
        %v820 = vadd.f32 %v631, %v819
        %v821 = vpop.f32.mrb[0].mxu0
        %v822 = vpop.f32.mrb[0].mxu0
        %v823 = vadd.f32 %v631, %v822
        %v824 = vpop.f32.mrb[0].mxu0
        %825 = vmatprep.mubr.bf16.mxu0 0
        %826 = vmatmul.mubr.bf16.gmra.mrb[0].mxu0 %v608
        %v827 = vpop.f32.mrb[0].mxu0
        %v828 = vadd.f32 %v631, %v827
        %v829 = vpop.f32.mrb[0].mxu0
        %v830 = vpop.f32.mrb[0].mxu0
        %v831 = vadd.f32 %v631, %v830
        %v832 = vpop.f32.mrb[0].mxu0
        %833 = vmatprep.mubr.bf16.mxu0 0
        %834 = vmatmul.mubr.bf16.gmra.mrb[0].mxu0 %v609
        %v835 = vpop.f32.mrb[0].mxu0
        %v836 = vadd.f32 %v631, %v835
        %v837 = vpop.f32.mrb[0].mxu0
        %v838 = vpop.f32.mrb[0].mxu0
        %v839 = vadd.f32 %v631, %v838
        %v840 = vpop.f32.mrb[0].mxu0
        %841 = vdwg.mxu0
        %v842 = vmax.f32 %v716, 0.0
        %v843 = vmax.f32 %v719, 0.0
        %v844 = vmax.f32 %v724, 0.0
        %v845 = vmax.f32 %v727, 0.0
        %v846 = vmax.f32 %v732, 0.0
        %v847 = vmax.f32 %v735, 0.0
        %v848 = vmax.f32 %v740, 0.0
        %v849 = vmax.f32 %v743, 0.0
        %v850 = vmax.f32 %v748, 0.0
        %v851 = vmax.f32 %v751, 0.0
        %v852 = vmax.f32 %v756, 0.0
        %v853 = vmax.f32 %v759, 0.0
        %v854 = vmax.f32 %v764, 0.0
        %v855 = vmax.f32 %v767, 0.0
        %v856 = vmax.f32 %v772, 0.0
        %v857 = vmax.f32 %v775, 0.0
        %v858 = vmax.f32 %v780, 0.0
        %v859 = vmax.f32 %v783, 0.0
        %v860 = vmax.f32 %v788, 0.0
        %v861 = vmax.f32 %v791, 0.0
        %v862 = vmax.f32 %v796, 0.0
        %v863 = vmax.f32 %v799, 0.0
        %v864 = vmax.f32 %v804, 0.0
        %v865 = vmax.f32 %v807, 0.0
        %v866 = vmax.f32 %v812, 0.0
        %v867 = vmax.f32 %v815, 0.0
        %v868 = vmax.f32 %v820, 0.0
        %v869 = vmax.f32 %v823, 0.0
        %v870 = vmax.f32 %v828, 0.0
        %v871 = vmax.f32 %v831, 0.0
        %v872 = vmax.f32 %v836, 0.0
        %v873 = vmax.f32 %v839, 0.0
        %v874 = vpack.c.bf16 %v843, %v842
        %v875 = vpack.c.bf16 %v845, %v844
        %v876 = vpack.c.bf16 %v847, %v846
        %v877 = vpack.c.bf16 %v849, %v848
        %v878 = vpack.c.bf16 %v851, %v850
        %v879 = vpack.c.bf16 %v853, %v852
        %v880 = vpack.c.bf16 %v855, %v854
        %v881 = vpack.c.bf16 %v857, %v856
        %v882 = vpack.c.bf16 %v859, %v858
        %v883 = vpack.c.bf16 %v861, %v860
        %v884 = vpack.c.bf16 %v863, %v862
        %v885 = vpack.c.bf16 %v865, %v864
        %v886 = vpack.c.bf16 %v867, %v866
        %v887 = vpack.c.bf16 %v869, %v868
        %v888 = vpack.c.bf16 %v871, %v870
        %v889 = vpack.c.bf16 %v873, %v872
        %v890 = vld [vmem:[%s5] sm:$0xf]
        %v891 = vld [vmem:[%s5 + $0x4] sm:$0xf]
        %v892 = vld [vmem:[%s5 + $0x8] sm:$0xf]
        %v893 = vld [vmem:[%s5 + $0xc] sm:$0xf]
        %v894 = vld [vmem:[%s5 + $0x10] sm:$0xf]
        %v895 = vld [vmem:[%s5 + $0x14] sm:$0xf]
        %v896 = vld [vmem:[%s5 + $0x18] sm:$0xf]
        %v897 = vld [vmem:[%s5 + $0x1c] sm:$0xf]
        %v898 = vld [vmem:[%s5 + $0x20] sm:$0xf]
        %v899 = vld [vmem:[%s5 + $0x24] sm:$0xf]
        %v900 = vld [vmem:[%s5 + $0x28] sm:$0xf]
        %v901 = vld [vmem:[%s5 + $0x2c] sm:$0xf]
        %v902 = vld [vmem:[%s5 + $0x30] sm:$0xf]
        %v903 = vld [vmem:[%s5 + $0x34] sm:$0xf]
        %v904 = vld [vmem:[%s5 + $0x38] sm:$0xf]
        %v905 = vld [vmem:[%s5 + $0x3c] sm:$0xf]
        %v906 = vld [vmem:[%s6] sm:$0x1]
        %v908 = vlaneseq
        %v909 = vshrl.u32 %v908, 7
        %v910 = vsub.s32 0, %v909
        %v911 = vrot.slane %v906, %v910
        %v929 = vunpack.c.l.b16 %v890
        %v930 = vunpack.c.l.b16 %v891
        %v931 = vunpack.c.l.b16 %v892
        %v932 = vunpack.c.l.b16 %v893
        %v933 = vunpack.c.l.b16 %v894
        %v934 = vunpack.c.l.b16 %v895
        %v935 = vunpack.c.l.b16 %v896
        %v936 = vunpack.c.l.b16 %v897
        %v937 = vunpack.c.l.b16 %v898
        %v938 = vunpack.c.l.b16 %v899
        %v939 = vunpack.c.l.b16 %v900
        %v940 = vunpack.c.l.b16 %v901
        %v941 = vunpack.c.l.b16 %v902
        %v942 = vunpack.c.l.b16 %v903
        %v943 = vunpack.c.l.b16 %v904
        %v944 = vunpack.c.l.b16 %v905
        %v945 = vpack.c.b16 %v930, %v929
        %v946 = vpack.c.b16 %v932, %v931
        %v947 = vpack.c.b16 %v934, %v933
        %v948 = vpack.c.b16 %v936, %v935
        %v949 = vpack.c.b16 %v938, %v937
        %v950 = vpack.c.b16 %v940, %v939
        %v951 = vpack.c.b16 %v942, %v941
        %v952 = vpack.c.b16 %v944, %v943
        %961 = vmatprep.subr.bf16.mxu0 0
        %962 = vmatpush1.bf16.msra.mxu0 %v945
        %963 = vmatprep.subr.bf16.mxu0 0
        %964 = vmatpush1.bf16.msra.mxu0 %v946
        %965 = vmatprep.subr.bf16.mxu0 0
        %966 = vmatpush1.bf16.msra.mxu0 %v947
        %967 = vmatprep.subr.bf16.mxu0 0
        %968 = vmatpush1.bf16.msra.mxu0 %v948
        %969 = vmatprep.subr.bf16.mxu0 0
        %970 = vmatpush1.bf16.msra.mxu0 %v949
        %971 = vmatprep.subr.bf16.mxu0 0
        %972 = vmatpush1.bf16.msra.mxu0 %v950
        %973 = vmatprep.subr.bf16.mxu0 0
        %974 = vmatpush1.bf16.msra.mxu0 %v951
        %975 = vmatprep.subr.bf16.mxu0 0
        %976 = vmatpush1.bf16.msra.mxu0 %v952
        %977 = vmatprep.subr.bf16.mxu0 0
        %978 = vmatpush1.bf16.msra.mxu0 0
        %979 = vmatprep.subr.bf16.mxu0 0
        %980 = vmatpush1.bf16.msra.mxu0 0
        %981 = vmatprep.subr.bf16.mxu0 0
        %982 = vmatpush1.bf16.msra.mxu0 0
        %983 = vmatprep.subr.bf16.mxu0 0
        %984 = vmatpush1.bf16.msra.mxu0 0
        %985 = vmatprep.subr.bf16.mxu0 0
        %986 = vmatpush1.bf16.msra.mxu0 0
        %987 = vmatprep.subr.bf16.mxu0 0
        %988 = vmatpush1.bf16.msra.mxu0 0
        %989 = vmatprep.subr.bf16.mxu0 0
        %990 = vmatpush1.bf16.msra.mxu0 0
        %991 = vmatprep.subr.bf16.mxu0 0
        %992 = vmatpush1.bf16.msra.mxu0 0
        %993 = vmatprep.mubr.bf16.mxu0 0
        %994 = vmatmul.mubr.bf16.gmra.mrb[0].mxu0 %v874
        %v995 = vpop.f32.mrb[0].mxu0
        %v996 = vadd.f32 %v911, %v995
        %v997 = vpop.f32.mrb[0].mxu0
        %v998 = vpop.f32.mrb[0].mxu0
        %v999 = vadd.f32 %v911, %v998
        %v1000 = vpop.f32.mrb[0].mxu0
        %1001 = vmatprep.mubr.bf16.mxu0 0
        %1002 = vmatmul.mubr.bf16.gmra.mrb[0].mxu0 %v875
        %v1003 = vpop.f32.mrb[0].mxu0
        %v1004 = vadd.f32 %v911, %v1003
        %v1005 = vpop.f32.mrb[0].mxu0
        %v1006 = vpop.f32.mrb[0].mxu0
        %v1007 = vadd.f32 %v911, %v1006
        %v1008 = vpop.f32.mrb[0].mxu0
        %1009 = vmatprep.mubr.bf16.mxu0 0
        %1010 = vmatmul.mubr.bf16.gmra.mrb[0].mxu0 %v876
        %v1011 = vpop.f32.mrb[0].mxu0
        %v1012 = vadd.f32 %v911, %v1011
        %v1013 = vpop.f32.mrb[0].mxu0
        %v1014 = vpop.f32.mrb[0].mxu0
        %v1015 = vadd.f32 %v911, %v1014
        %v1016 = vpop.f32.mrb[0].mxu0
        %1017 = vmatprep.mubr.bf16.mxu0 0
        %1018 = vmatmul.mubr.bf16.gmra.mrb[0].mxu0 %v877
        %v1019 = vpop.f32.mrb[0].mxu0
        %v1020 = vadd.f32 %v911, %v1019
        %v1021 = vpop.f32.mrb[0].mxu0
        %v1022 = vpop.f32.mrb[0].mxu0
        %v1023 = vadd.f32 %v911, %v1022
        %v1024 = vpop.f32.mrb[0].mxu0
        %1025 = vmatprep.mubr.bf16.mxu0 0
        %1026 = vmatmul.mubr.bf16.gmra.mrb[0].mxu0 %v878
        %v1027 = vpop.f32.mrb[0].mxu0
        %v1028 = vadd.f32 %v911, %v1027
        %v1029 = vpop.f32.mrb[0].mxu0
        %v1030 = vpop.f32.mrb[0].mxu0
        %v1031 = vadd.f32 %v911, %v1030
        %v1032 = vpop.f32.mrb[0].mxu0
        %1033 = vmatprep.mubr.bf16.mxu0 0
        %1034 = vmatmul.mubr.bf16.gmra.mrb[0].mxu0 %v879
        %v1035 = vpop.f32.mrb[0].mxu0
        %v1036 = vadd.f32 %v911, %v1035
        %v1037 = vpop.f32.mrb[0].mxu0
        %v1038 = vpop.f32.mrb[0].mxu0
        %v1039 = vadd.f32 %v911, %v1038
        %v1040 = vpop.f32.mrb[0].mxu0
        %1041 = vmatprep.mubr.bf16.mxu0 0
        %1042 = vmatmul.mubr.bf16.gmra.mrb[0].mxu0 %v880
        %v1043 = vpop.f32.mrb[0].mxu0
        %v1044 = vadd.f32 %v911, %v1043
        %v1045 = vpop.f32.mrb[0].mxu0
        %v1046 = vpop.f32.mrb[0].mxu0
        %v1047 = vadd.f32 %v911, %v1046
        %v1048 = vpop.f32.mrb[0].mxu0
        %1049 = vmatprep.mubr.bf16.mxu0 0
        %1050 = vmatmul.mubr.bf16.gmra.mrb[0].mxu0 %v881
        %v1051 = vpop.f32.mrb[0].mxu0
        %v1052 = vadd.f32 %v911, %v1051
        %v1053 = vpop.f32.mrb[0].mxu0
        %v1054 = vpop.f32.mrb[0].mxu0
        %v1055 = vadd.f32 %v911, %v1054
        %v1056 = vpop.f32.mrb[0].mxu0
        %1057 = vmatprep.mubr.bf16.mxu0 0
        %1058 = vmatmul.mubr.bf16.gmra.mrb[0].mxu0 %v882
        %v1059 = vpop.f32.mrb[0].mxu0
        %v1060 = vadd.f32 %v911, %v1059
        %v1061 = vpop.f32.mrb[0].mxu0
        %v1062 = vpop.f32.mrb[0].mxu0
        %v1063 = vadd.f32 %v911, %v1062
        %v1064 = vpop.f32.mrb[0].mxu0
        %1065 = vmatprep.mubr.bf16.mxu0 0
        %1066 = vmatmul.mubr.bf16.gmra.mrb[0].mxu0 %v883
        %v1067 = vpop.f32.mrb[0].mxu0
        %v1068 = vadd.f32 %v911, %v1067
        %v1069 = vpop.f32.mrb[0].mxu0
        %v1070 = vpop.f32.mrb[0].mxu0
        %v1071 = vadd.f32 %v911, %v1070
        %v1072 = vpop.f32.mrb[0].mxu0
        %1073 = vmatprep.mubr.bf16.mxu0 0
        %1074 = vmatmul.mubr.bf16.gmra.mrb[0].mxu0 %v884
        %v1075 = vpop.f32.mrb[0].mxu0
        %v1076 = vadd.f32 %v911, %v1075
        %v1077 = vpop.f32.mrb[0].mxu0
        %v1078 = vpop.f32.mrb[0].mxu0
        %v1079 = vadd.f32 %v911, %v1078
        %v1080 = vpop.f32.mrb[0].mxu0
        %1081 = vmatprep.mubr.bf16.mxu0 0
        %1082 = vmatmul.mubr.bf16.gmra.mrb[0].mxu0 %v885
        %v1083 = vpop.f32.mrb[0].mxu0
        %v1084 = vadd.f32 %v911, %v1083
        %v1085 = vpop.f32.mrb[0].mxu0
        %v1086 = vpop.f32.mrb[0].mxu0
        %v1087 = vadd.f32 %v911, %v1086
        %v1088 = vpop.f32.mrb[0].mxu0
        %1089 = vmatprep.mubr.bf16.mxu0 0
        %1090 = vmatmul.mubr.bf16.gmra.mrb[0].mxu0 %v886
        %v1091 = vpop.f32.mrb[0].mxu0
        %v1092 = vadd.f32 %v911, %v1091
        %v1093 = vpop.f32.mrb[0].mxu0
        %v1094 = vpop.f32.mrb[0].mxu0
        %v1095 = vadd.f32 %v911, %v1094
        %v1096 = vpop.f32.mrb[0].mxu0
        %1097 = vmatprep.mubr.bf16.mxu0 0
        %1098 = vmatmul.mubr.bf16.gmra.mrb[0].mxu0 %v887
        %v1099 = vpop.f32.mrb[0].mxu0
        %v1100 = vadd.f32 %v911, %v1099
        %v1101 = vpop.f32.mrb[0].mxu0
        %v1102 = vpop.f32.mrb[0].mxu0
        %v1103 = vadd.f32 %v911, %v1102
        %v1104 = vpop.f32.mrb[0].mxu0
        %1105 = vmatprep.mubr.bf16.mxu0 0
        %1106 = vmatmul.mubr.bf16.gmra.mrb[0].mxu0 %v888
        %v1107 = vpop.f32.mrb[0].mxu0
        %v1108 = vadd.f32 %v911, %v1107
        %v1109 = vpop.f32.mrb[0].mxu0
        %v1110 = vpop.f32.mrb[0].mxu0
        %v1111 = vadd.f32 %v911, %v1110
        %v1112 = vpop.f32.mrb[0].mxu0
        %1113 = vmatprep.mubr.bf16.mxu0 0
        %1114 = vmatmul.mubr.bf16.gmra.mrb[0].mxu0 %v889
        %v1115 = vpop.f32.mrb[0].mxu0
        %v1116 = vadd.f32 %v911, %v1115
        %v1117 = vpop.f32.mrb[0].mxu0
        %v1118 = vpop.f32.mrb[0].mxu0
        %v1119 = vadd.f32 %v911, %v1118
        %v1120 = vpop.f32.mrb[0].mxu0
        %1121 = vdwg.mxu0
        %1122 = vmax.xlane.f32.xlu0 %v996
        %v1123 = vpop.xlane.xlu0 %1122
        %1124 = vmax.xlane.f32.xlu0 %v999
        %v1125 = vpop.xlane.xlu0 %1124
        %1126 = vmax.xlane.f32.xlu0 %v1004
        %v1127 = vpop.xlane.xlu0 %1126
        %1128 = vmax.xlane.f32.xlu0 %v1007
        %v1129 = vpop.xlane.xlu0 %1128
        %1130 = vmax.xlane.f32.xlu0 %v1012
        %v1131 = vpop.xlane.xlu0 %1130
        %1132 = vmax.xlane.f32.xlu0 %v1015
        %v1133 = vpop.xlane.xlu0 %1132
        %1134 = vmax.xlane.f32.xlu0 %v1020
        %v1135 = vpop.xlane.xlu0 %1134
        %1136 = vmax.xlane.f32.xlu0 %v1023
        %v1137 = vpop.xlane.xlu0 %1136
        %1138 = vmax.xlane.f32.xlu0 %v1028
        %v1139 = vpop.xlane.xlu0 %1138
        %1140 = vmax.xlane.f32.xlu0 %v1031
        %v1141 = vpop.xlane.xlu0 %1140
        %1142 = vmax.xlane.f32.xlu0 %v1036
        %v1143 = vpop.xlane.xlu0 %1142
        %1144 = vmax.xlane.f32.xlu0 %v1039
        %v1145 = vpop.xlane.xlu0 %1144
        %1146 = vmax.xlane.f32.xlu0 %v1044
        %v1147 = vpop.xlane.xlu0 %1146
        %1148 = vmax.xlane.f32.xlu0 %v1047
        %v1149 = vpop.xlane.xlu0 %1148
        %1150 = vmax.xlane.f32.xlu0 %v1052
        %v1151 = vpop.xlane.xlu0 %1150
        %1152 = vmax.xlane.f32.xlu0 %v1055
        %v1153 = vpop.xlane.xlu0 %1152
        %1154 = vmax.xlane.f32.xlu0 %v1060
        %v1155 = vpop.xlane.xlu0 %1154
        %1156 = vmax.xlane.f32.xlu0 %v1063
        %v1157 = vpop.xlane.xlu0 %1156
        %1158 = vmax.xlane.f32.xlu0 %v1068
        %v1159 = vpop.xlane.xlu0 %1158
        %1160 = vmax.xlane.f32.xlu0 %v1071
        %v1161 = vpop.xlane.xlu0 %1160
        %1162 = vmax.xlane.f32.xlu0 %v1076
        %v1163 = vpop.xlane.xlu0 %1162
        %1164 = vmax.xlane.f32.xlu0 %v1079
        %v1165 = vpop.xlane.xlu0 %1164
        %1166 = vmax.xlane.f32.xlu0 %v1084
        %v1167 = vpop.xlane.xlu0 %1166
        %1168 = vmax.xlane.f32.xlu0 %v1087
        %v1169 = vpop.xlane.xlu0 %1168
        %1170 = vmax.xlane.f32.xlu0 %v1092
        %v1171 = vpop.xlane.xlu0 %1170
        %1172 = vmax.xlane.f32.xlu0 %v1095
        %v1173 = vpop.xlane.xlu0 %1172
        %1174 = vmax.xlane.f32.xlu0 %v1100
        %v1175 = vpop.xlane.xlu0 %1174
        %1176 = vmax.xlane.f32.xlu0 %v1103
        %v1177 = vpop.xlane.xlu0 %1176
        %1178 = vmax.xlane.f32.xlu0 %v1108
        %v1179 = vpop.xlane.xlu0 %1178
        %1180 = vmax.xlane.f32.xlu0 %v1111
        %v1181 = vpop.xlane.xlu0 %1180
        %1182 = vmax.xlane.f32.xlu0 %v1116
        %v1183 = vpop.xlane.xlu0 %1182
        %1184 = vmax.xlane.f32.xlu0 %v1119
        %v1185 = vpop.xlane.xlu0 %1184
        %v1186 = vsub.f32 %v996, %v1123
        %v1187 = vsub.f32 %v999, %v1125
        %v1188 = vsub.f32 %v1004, %v1127
        %v1189 = vsub.f32 %v1007, %v1129
        %v1190 = vsub.f32 %v1012, %v1131
        %v1191 = vsub.f32 %v1015, %v1133
        %v1192 = vsub.f32 %v1020, %v1135
        %v1193 = vsub.f32 %v1023, %v1137
        %v1194 = vsub.f32 %v1028, %v1139
        %v1195 = vsub.f32 %v1031, %v1141
        %v1196 = vsub.f32 %v1036, %v1143
        %v1197 = vsub.f32 %v1039, %v1145
        %v1198 = vsub.f32 %v1044, %v1147
        %v1199 = vsub.f32 %v1047, %v1149
        %v1200 = vsub.f32 %v1052, %v1151
        %v1201 = vsub.f32 %v1055, %v1153
        %v1202 = vsub.f32 %v1060, %v1155
        %v1203 = vsub.f32 %v1063, %v1157
        %v1204 = vsub.f32 %v1068, %v1159
        %v1205 = vsub.f32 %v1071, %v1161
        %v1206 = vsub.f32 %v1076, %v1163
        %v1207 = vsub.f32 %v1079, %v1165
        %v1208 = vsub.f32 %v1084, %v1167
        %v1209 = vsub.f32 %v1087, %v1169
        %v1210 = vsub.f32 %v1092, %v1171
        %v1211 = vsub.f32 %v1095, %v1173
        %v1212 = vsub.f32 %v1100, %v1175
        %v1213 = vsub.f32 %v1103, %v1177
        %v1214 = vsub.f32 %v1108, %v1179
        %v1215 = vsub.f32 %v1111, %v1181
        %v1216 = vsub.f32 %v1116, %v1183
        %v1217 = vsub.f32 %v1119, %v1185
        %v1218 = vmul.f32 %v1186, 1.442695
        %v1219 = vpow.pop %v1218
        %v1220 = vmul.f32 %v1187, 1.442695
        %v1221 = vpow.pop %v1220
        %v1222 = vmul.f32 %v1188, 1.442695
        %v1223 = vpow.pop %v1222
        %v1224 = vmul.f32 %v1189, 1.442695
        %v1225 = vpow.pop %v1224
        %v1226 = vmul.f32 %v1190, 1.442695
        %v1227 = vpow.pop %v1226
        %v1228 = vmul.f32 %v1191, 1.442695
        %v1229 = vpow.pop %v1228
        %v1230 = vmul.f32 %v1192, 1.442695
        %v1231 = vpow.pop %v1230
        %v1232 = vmul.f32 %v1193, 1.442695
        %v1233 = vpow.pop %v1232
        %v1234 = vmul.f32 %v1194, 1.442695
        %v1235 = vpow.pop %v1234
        %v1236 = vmul.f32 %v1195, 1.442695
        %v1237 = vpow.pop %v1236
        %v1238 = vmul.f32 %v1196, 1.442695
        %v1239 = vpow.pop %v1238
        %v1240 = vmul.f32 %v1197, 1.442695
        %v1241 = vpow.pop %v1240
        %v1242 = vmul.f32 %v1198, 1.442695
        %v1243 = vpow.pop %v1242
        %v1244 = vmul.f32 %v1199, 1.442695
        %v1245 = vpow.pop %v1244
        %v1246 = vmul.f32 %v1200, 1.442695
        %v1247 = vpow.pop %v1246
        %v1248 = vmul.f32 %v1201, 1.442695
        %v1249 = vpow.pop %v1248
        %v1250 = vmul.f32 %v1202, 1.442695
        %v1251 = vpow.pop %v1250
        %v1252 = vmul.f32 %v1203, 1.442695
        %v1253 = vpow.pop %v1252
        %v1254 = vmul.f32 %v1204, 1.442695
        %v1255 = vpow.pop %v1254
        %v1256 = vmul.f32 %v1205, 1.442695
        %v1257 = vpow.pop %v1256
        %v1258 = vmul.f32 %v1206, 1.442695
        %v1259 = vpow.pop %v1258
        %v1260 = vmul.f32 %v1207, 1.442695
        %v1261 = vpow.pop %v1260
        %v1262 = vmul.f32 %v1208, 1.442695
        %v1263 = vpow.pop %v1262
        %v1264 = vmul.f32 %v1209, 1.442695
        %v1265 = vpow.pop %v1264
        %v1266 = vmul.f32 %v1210, 1.442695
        %v1267 = vpow.pop %v1266
        %v1268 = vmul.f32 %v1211, 1.442695
        %v1269 = vpow.pop %v1268
        %v1270 = vmul.f32 %v1212, 1.442695
        %v1271 = vpow.pop %v1270
        %v1272 = vmul.f32 %v1213, 1.442695
        %v1273 = vpow.pop %v1272
        %v1274 = vmul.f32 %v1214, 1.442695
        %v1275 = vpow.pop %v1274
        %v1276 = vmul.f32 %v1215, 1.442695
        %v1277 = vpow.pop %v1276
        %v1278 = vmul.f32 %v1216, 1.442695
        %v1279 = vpow.pop %v1278
        %v1280 = vmul.f32 %v1217, 1.442695
        %v1281 = vpow.pop %v1280
        %1282 = vadd.xlane.f32.xlu0 %v1219
        %v1283 = vpop.xlane.xlu0 %1282
        %1284 = vadd.xlane.f32.xlu0 %v1221
        %v1285 = vpop.xlane.xlu0 %1284
        %1286 = vadd.xlane.f32.xlu0 %v1223
        %v1287 = vpop.xlane.xlu0 %1286
        %1288 = vadd.xlane.f32.xlu0 %v1225
        %v1289 = vpop.xlane.xlu0 %1288
        %1290 = vadd.xlane.f32.xlu0 %v1227
        %v1291 = vpop.xlane.xlu0 %1290
        %1292 = vadd.xlane.f32.xlu0 %v1229
        %v1293 = vpop.xlane.xlu0 %1292
        %1294 = vadd.xlane.f32.xlu0 %v1231
        %v1295 = vpop.xlane.xlu0 %1294
        %1296 = vadd.xlane.f32.xlu0 %v1233
        %v1297 = vpop.xlane.xlu0 %1296
        %1298 = vadd.xlane.f32.xlu0 %v1235
        %v1299 = vpop.xlane.xlu0 %1298
        %1300 = vadd.xlane.f32.xlu0 %v1237
        %v1301 = vpop.xlane.xlu0 %1300
        %1302 = vadd.xlane.f32.xlu0 %v1239
        %v1303 = vpop.xlane.xlu0 %1302
        %1304 = vadd.xlane.f32.xlu0 %v1241
        %v1305 = vpop.xlane.xlu0 %1304
        %1306 = vadd.xlane.f32.xlu0 %v1243
        %v1307 = vpop.xlane.xlu0 %1306
        %1308 = vadd.xlane.f32.xlu0 %v1245
        %v1309 = vpop.xlane.xlu0 %1308
        %1310 = vadd.xlane.f32.xlu0 %v1247
        %v1311 = vpop.xlane.xlu0 %1310
        %1312 = vadd.xlane.f32.xlu0 %v1249
        %v1313 = vpop.xlane.xlu0 %1312
        %1314 = vadd.xlane.f32.xlu0 %v1251
        %v1315 = vpop.xlane.xlu0 %1314
        %1316 = vadd.xlane.f32.xlu0 %v1253
        %v1317 = vpop.xlane.xlu0 %1316
        %1318 = vadd.xlane.f32.xlu0 %v1255
        %v1319 = vpop.xlane.xlu0 %1318
        %1320 = vadd.xlane.f32.xlu0 %v1257
        %v1321 = vpop.xlane.xlu0 %1320
        %1322 = vadd.xlane.f32.xlu0 %v1259
        %v1323 = vpop.xlane.xlu0 %1322
        %1324 = vadd.xlane.f32.xlu0 %v1261
        %v1325 = vpop.xlane.xlu0 %1324
        %1326 = vadd.xlane.f32.xlu0 %v1263
        %v1327 = vpop.xlane.xlu0 %1326
        %1328 = vadd.xlane.f32.xlu0 %v1265
        %v1329 = vpop.xlane.xlu0 %1328
        %1330 = vadd.xlane.f32.xlu0 %v1267
        %v1331 = vpop.xlane.xlu0 %1330
        %1332 = vadd.xlane.f32.xlu0 %v1269
        %v1333 = vpop.xlane.xlu0 %1332
        %1334 = vadd.xlane.f32.xlu0 %v1271
        %v1335 = vpop.xlane.xlu0 %1334
        %1336 = vadd.xlane.f32.xlu0 %v1273
        %v1337 = vpop.xlane.xlu0 %1336
        %1338 = vadd.xlane.f32.xlu0 %v1275
        %v1339 = vpop.xlane.xlu0 %1338
        %1340 = vadd.xlane.f32.xlu0 %v1277
        %v1341 = vpop.xlane.xlu0 %1340
        %1342 = vadd.xlane.f32.xlu0 %v1279
        %v1343 = vpop.xlane.xlu0 %1342
        %1344 = vadd.xlane.f32.xlu0 %v1281
        %v1345 = vpop.xlane.xlu0 %1344
        %v1346 = vlog2.pop %v1283
        %v1347 = vmul.f32 %v1346, 0.6931472
        %v1348 = vlog2.pop %v1285
        %v1349 = vmul.f32 %v1348, 0.6931472
        %v1350 = vlog2.pop %v1287
        %v1351 = vmul.f32 %v1350, 0.6931472
        %v1352 = vlog2.pop %v1289
        %v1353 = vmul.f32 %v1352, 0.6931472
        %v1354 = vlog2.pop %v1291
        %v1355 = vmul.f32 %v1354, 0.6931472
        %v1356 = vlog2.pop %v1293
        %v1357 = vmul.f32 %v1356, 0.6931472
        %v1358 = vlog2.pop %v1295
        %v1359 = vmul.f32 %v1358, 0.6931472
        %v1360 = vlog2.pop %v1297
        %v1361 = vmul.f32 %v1360, 0.6931472
        %v1362 = vlog2.pop %v1299
        %v1363 = vmul.f32 %v1362, 0.6931472
        %v1364 = vlog2.pop %v1301
        %v1365 = vmul.f32 %v1364, 0.6931472
        %v1366 = vlog2.pop %v1303
        %v1367 = vmul.f32 %v1366, 0.6931472
        %v1368 = vlog2.pop %v1305
        %v1369 = vmul.f32 %v1368, 0.6931472
        %v1370 = vlog2.pop %v1307
        %v1371 = vmul.f32 %v1370, 0.6931472
        %v1372 = vlog2.pop %v1309
        %v1373 = vmul.f32 %v1372, 0.6931472
        %v1374 = vlog2.pop %v1311
        %v1375 = vmul.f32 %v1374, 0.6931472
        %v1376 = vlog2.pop %v1313
        %v1377 = vmul.f32 %v1376, 0.6931472
        %v1378 = vlog2.pop %v1315
        %v1379 = vmul.f32 %v1378, 0.6931472
        %v1380 = vlog2.pop %v1317
        %v1381 = vmul.f32 %v1380, 0.6931472
        %v1382 = vlog2.pop %v1319
        %v1383 = vmul.f32 %v1382, 0.6931472
        %v1384 = vlog2.pop %v1321
        %v1385 = vmul.f32 %v1384, 0.6931472
        %v1386 = vlog2.pop %v1323
        %v1387 = vmul.f32 %v1386, 0.6931472
        %v1388 = vlog2.pop %v1325
        %v1389 = vmul.f32 %v1388, 0.6931472
        %v1390 = vlog2.pop %v1327
        %v1391 = vmul.f32 %v1390, 0.6931472
        %v1392 = vlog2.pop %v1329
        %v1393 = vmul.f32 %v1392, 0.6931472
        %v1394 = vlog2.pop %v1331
        %v1395 = vmul.f32 %v1394, 0.6931472
        %v1396 = vlog2.pop %v1333
        %v1397 = vmul.f32 %v1396, 0.6931472
        %v1398 = vlog2.pop %v1335
        %v1399 = vmul.f32 %v1398, 0.6931472
        %v1400 = vlog2.pop %v1337
        %v1401 = vmul.f32 %v1400, 0.6931472
        %v1402 = vlog2.pop %v1339
        %v1403 = vmul.f32 %v1402, 0.6931472
        %v1404 = vlog2.pop %v1341
        %v1405 = vmul.f32 %v1404, 0.6931472
        %v1406 = vlog2.pop %v1343
        %v1407 = vmul.f32 %v1406, 0.6931472
        %v1408 = vlog2.pop %v1345
        %v1409 = vmul.f32 %v1408, 0.6931472
        %v1410 = vsub.f32 %v1186, %v1347
        %v1411 = vsub.f32 %v1187, %v1349
        %v1412 = vsub.f32 %v1188, %v1351
        %v1413 = vsub.f32 %v1189, %v1353
        %v1414 = vsub.f32 %v1190, %v1355
        %v1415 = vsub.f32 %v1191, %v1357
        %v1416 = vsub.f32 %v1192, %v1359
        %v1417 = vsub.f32 %v1193, %v1361
        %v1418 = vsub.f32 %v1194, %v1363
        %v1419 = vsub.f32 %v1195, %v1365
        %v1420 = vsub.f32 %v1196, %v1367
        %v1421 = vsub.f32 %v1197, %v1369
        %v1422 = vsub.f32 %v1198, %v1371
        %v1423 = vsub.f32 %v1199, %v1373
        %v1424 = vsub.f32 %v1200, %v1375
        %v1425 = vsub.f32 %v1201, %v1377
        %v1426 = vsub.f32 %v1202, %v1379
        %v1427 = vsub.f32 %v1203, %v1381
        %v1428 = vsub.f32 %v1204, %v1383
        %v1429 = vsub.f32 %v1205, %v1385
        %v1430 = vsub.f32 %v1206, %v1387
        %v1431 = vsub.f32 %v1207, %v1389
        %v1432 = vsub.f32 %v1208, %v1391
        %v1433 = vsub.f32 %v1209, %v1393
        %v1434 = vsub.f32 %v1210, %v1395
        %v1435 = vsub.f32 %v1211, %v1397
        %v1436 = vsub.f32 %v1212, %v1399
        %v1437 = vsub.f32 %v1213, %v1401
        %v1438 = vsub.f32 %v1214, %v1403
        %v1439 = vsub.f32 %v1215, %v1405
        %v1440 = vsub.f32 %v1216, %v1407
        %v1441 = vsub.f32 %v1217, %v1409
        %1442 = vst [vmem:[%s272] sm:$0xff] %v1410
        %1443 = vst [vmem:[%s272 + $0x8] sm:$0xff] %v1411
        %1444 = vst [vmem:[%s272 + $0x10] sm:$0xff] %v1412
        %1445 = vst [vmem:[%s272 + $0x18] sm:$0xff] %v1413
        %1446 = vst [vmem:[%s272 + $0x20] sm:$0xff] %v1414
        %1447 = vst [vmem:[%s272 + $0x28] sm:$0xff] %v1415
        %1448 = vst [vmem:[%s272 + $0x30] sm:$0xff] %v1416
        %1449 = vst [vmem:[%s272 + $0x38] sm:$0xff] %v1417
        %1450 = vst [vmem:[%s272 + $0x40] sm:$0xff] %v1418
        %1451 = vst [vmem:[%s272 + $0x48] sm:$0xff] %v1419
        %1452 = vst [vmem:[%s272 + $0x50] sm:$0xff] %v1420
        %1453 = vst [vmem:[%s272 + $0x58] sm:$0xff] %v1421
        %1454 = vst [vmem:[%s272 + $0x60] sm:$0xff] %v1422
        %1455 = vst [vmem:[%s272 + $0x68] sm:$0xff] %v1423
        %1456 = vst [vmem:[%s272 + $0x70] sm:$0xff] %v1424
        %1457 = vst [vmem:[%s272 + $0x78] sm:$0xff] %v1425
        %1458 = vst [vmem:[%s272 + $0x80] sm:$0xff] %v1426
        %1459 = vst [vmem:[%s272 + $0x88] sm:$0xff] %v1427
        %1460 = vst [vmem:[%s272 + $0x90] sm:$0xff] %v1428
        %1461 = vst [vmem:[%s272 + $0x98] sm:$0xff] %v1429
        %1462 = vst [vmem:[%s272 + $0xa0] sm:$0xff] %v1430
        %1463 = vst [vmem:[%s272 + $0xa8] sm:$0xff] %v1431
        %1464 = vst [vmem:[%s272 + $0xb0] sm:$0xff] %v1432
        %1465 = vst [vmem:[%s272 + $0xb8] sm:$0xff] %v1433
        %1466 = vst [vmem:[%s272 + $0xc0] sm:$0xff] %v1434
        %1467 = vst [vmem:[%s272 + $0xc8] sm:$0xff] %v1435
        %1468 = vst [vmem:[%s272 + $0xd0] sm:$0xff] %v1436
        %1469 = vst [vmem:[%s272 + $0xd8] sm:$0xff] %v1437
        %1470 = vst [vmem:[%s272 + $0xe0] sm:$0xff] %v1438
        %1471 = vst [vmem:[%s272 + $0xe8] sm:$0xff] %v1439
        %1472 = vst [vmem:[%s272 + $0xf0] sm:$0xff] %v1440
        %1473 = vst [vmem:[%s272 + $0xf8] sm:$0xff] %v1441
        %s1474 = sand.u32 %s181, 1
        %s1475 = scalar_lea.sflag [#allocation3], %s1474
        %s1476 = sand.u32 %s181, 1
        %s1477 = smul.addr %s1476, 256
        %s1478 = scalar_lea.vmem [#allocation2], %s1477
        // Predicated region
        $region49: #{tpu_custom_call.1} parent=47 // pred_check
          %p1479 = pneg %p191
        $region50: #{tpu_custom_call.1} parent=47 // pred_check_branch
          %1481 = sbr.rel (%p1479) target = $region52
        $region51: #{tpu_custom_call.1} parent=47 // pred_region
          %s1482 = smul.u32 32, %s21
          %s1484 = ssub.s32 4096, 4096
          %1485 = vsyncadd %s1475, %s1484
          %s1486 = smul.addr %s1482, 128
          %s1487 = scalar_lea.hbm %s7, %s1486
          %s1488 = sshll.u32 %s1478, 4
          %s1489 = int_to_ptr.vmem [resolvable:$true] %s1488
          %1494 = dma.vmem_to_hbm [thread:$0]  %s1489, 4096, %s1487, %s1475, 128, 128, 8
        $region52: #{tpu_custom_call.1} parent=47 // pred_fallthru
          _
      $region48: #{tpu_custom_call.1} parent=5 // pred_fallthru
        _
      %p1495 = scmp.le.s32.totalorder 2, %s16
      // Predicated region
      $region53: #{tpu_custom_call.1} parent=5 // pred_check
        %p1496 = pneg %p1495
      $region54: #{tpu_custom_call.1} parent=5 // pred_check_branch
        %1498 = sbr.rel (%p1496) target = $region56
      $region55: #{tpu_custom_call.1} parent=5 // pred_region
        %s1499 = ssub.s32 %s16, 2
        // Predicated region
        $region57: #{tpu_custom_call.1} parent=55 // pred_check
          %p1500 = pneg %p197
        $region58: #{tpu_custom_call.1} parent=55 // pred_check_branch
          %1502 = sbr.rel (%p1500) target = $region60
        $region59: #{tpu_custom_call.1} parent=55 // pred_region
          %s1503 = sand.u32 %s182, 1
          %s1504 = scalar_lea.sflag [#allocation3], %s1503
          %s1505 = sand.u32 %s182, 1
          %s1506 = smul.addr %s1505, 256
          %s1507 = scalar_lea.vmem [#allocation2], %s1506
          %1508 = dma.done %s1504, 4096
        $region60: #{tpu_custom_call.1} parent=55 // pred_fallthru
          _
      $region56: #{tpu_custom_call.1} parent=5 // pred_fallthru
        _
    $region6: #{tpu_custom_call.1} parent=1 // loop_footer
      %s20 = sadd.s32 1, %s16
    $region7: #{tpu_custom_call.1} parent=1 // loop_footer_branch
      %15 = sbr.rel target = $region3
    $region8: #{tpu_custom_call.1} parent=1 // loop_exit
      _
    %1509 = vsyncpa [#allocation3], 1
    %s1510 = scalar_lea.sflag [#allocation3], 1
    %1511 = vsyncpa %s1510, 1

</llo_original>
